<compile_context>
chip_gen: v5e
topology: v5e:2x2
jax: 0.10.0
libtpu: 0.0.40
codegen_flags: <defaults>
</compile_context>

<pallas_src>
import jax
import jax.numpy as jnp
from jax.experimental import pallas as pl
from jax.experimental.pallas import tpu as pltpu

# ---------------- config (small, consistent with the module) ----------------
B, T, S = 2, 8, 8
D = 32            # input_dim
H = 8             # num_heads
HD = D // H       # head_dim = 4
HID = 32          # hidden_dim
FF = 2 * HID      # fc1 output dim
EPS = 1e-5        # torch.nn.LayerNorm default eps
NEG = -1e30       # "minus infinity" for key padding


def _ln(x, g, b):
    m = jnp.mean(x, axis=-1, keepdims=True)
    v = jnp.mean((x - m) ** 2, axis=-1, keepdims=True)
    return (x - m) * jax.lax.rsqrt(v + EPS) * g + b


# ---------------------------- Pallas kernel ---------------------------------
def cross_attn_kernel(q_ref, kt_ref, v_ref, mask_ref, cond_ref,
                      attn_w_ref, uk_ref, wc_ref, w1_ref, w2_ref, vec_ref,
                      out_ref):
    f32 = jnp.float32
    bf16 = jnp.bfloat16

    qf = q_ref[...]                      # (T, D)  f32   query rows of this batch
    kt = kt_ref[0]                       # (D, S)  bf16  keys (pre-transposed)
    vf = v_ref[...]                      # (S, D)  bf16  values
    mask = mask_ref[...]                 # (T, S)  f32   additive pad + attn bias
    cond = cond_ref[0]                   # (1, D)  f32

    ln1_g, ln1_b = vec_ref[0:1, :], vec_ref[1:2, :]
    ln2_g, ln2_b = vec_ref[2:3, :], vec_ref[3:4, :]
    b_attn = vec_ref[4:5, :]             # bo + sum_h bv_h @ Wo_h

    # ---- cond_mlp: SiLU -> Linear(D, 6D); chunk-major weights, bias = last row ----
    cb = (cond * jax.nn.sigmoid(cond)).astype(bf16)            # (1, D)
    mods = []
    for g in range(6):
        mods.append(jnp.dot(cb, wc_ref[g, :D, :], preferred_element_type=f32)
                    + wc_ref[g, D:D + 1, :].astype(f32))       # (1, D)
    shift_msa, scale_msa, gate_msa, shift_mlp, scale_mlp, gate_mlp = mods

    # ---- LayerNorm + AdaLN modulate ----
    qm = _ln(qf, ln1_g, ln1_b) * (1.0 + scale_msa) + shift_msa  # (T, D) f32
    qmb = qm.astype(bf16)

    # ---- attention with folded per-head (D, D) weights ----
    # s_h = qm @ (scaling * Wq_h Wk_h^T) @ k^T  +  k @ (scaling * Wk_h bq_h)
    # (terms constant along the key axis are dropped: softmax-invariant)
    krow = jnp.dot(uk_ref[...], kt, preferred_element_type=f32)  # (H, S)
    o_parts = []
    for h in range(H):
        qa = jnp.dot(qmb, attn_w_ref[h], preferred_element_type=f32)        # (T, D)
        s_h = jnp.dot(qa.astype(bf16), kt, preferred_element_type=f32)      # (T, S)
        s_h = s_h + krow[h:h + 1, :] + mask
        s_h = s_h - jnp.max(s_h, axis=-1, keepdims=True)
        p_h = jnp.exp(s_h)
        p_h = p_h * pl.reciprocal(jnp.sum(p_h, axis=-1, keepdims=True), approx=True)
        # attn_drop: identity (eval mode)
        vo_h = jnp.dot(vf, attn_w_ref[H + h], preferred_element_type=f32)   # (S, D)
        o_parts.append(jnp.dot(p_h.astype(bf16), vo_h.astype(bf16),
                               preferred_element_type=f32))                 # (T, D)
    # balanced tree-sum over heads (independent MXU results, no serial chain)
    while len(o_parts) > 1:
        o_parts = [o_parts[i] + o_parts[i + 1] for i in range(0, len(o_parts), 2)]
    attn_out = o_parts[0] + b_attn                                          # (T, D)

    # dropout_module: identity (eval mode)
    x = gate_msa * attn_out + qf                           # residual 1

    # ---- final LN + AdaLN modulate + MLP (bias = last weight row) ----
    xm = _ln(x, ln2_g, ln2_b) * (1.0 + scale_mlp) + shift_mlp
    h1 = jnp.maximum(
        jnp.dot(xm.astype(bf16), w1_ref[:D, :], preferred_element_type=f32)
        + w1_ref[D:D + 1, :].astype(f32), 0.0)             # (T, FF)
    y = (jnp.dot(h1.astype(bf16), w2_ref[:FF, :], preferred_element_type=f32)
         + w2_ref[FF:FF + 1, :].astype(f32))               # (T, D)

    out_ref[...] = (gate_mlp * y + x).astype(out_ref.dtype)


# ------------------------------ wrapper --------------------------------------
def fold_weights(params):
    scaling = float(HD) ** -0.5
    wq_h = params["wq"].reshape(D, H, HD).transpose(1, 0, 2)   # (H, D, HD)
    wk_h = params["wk"].reshape(D, H, HD).transpose(1, 0, 2)
    wv_h = params["wv"].reshape(D, H, HD).transpose(1, 0, 2)
    wo_h = params["wo"].reshape(H, HD, D)                      # (H, HD, D)
    bq_h = params["bq"].reshape(H, HD)
    bv_h = params["bv"].reshape(H, HD)

    a_h = scaling * jnp.einsum("hdk,hek->hde", wq_h, wk_h)     # (H, D, D)
    uk = scaling * jnp.einsum("hdk,hk->hd", wk_h, bq_h)        # (H, D)
    wvo_h = jnp.einsum("hdk,hke->hde", wv_h, wo_h)             # (H, D, D)
    b_attn = params["bo"] + jnp.einsum("hk,hkd->d", bv_h, wo_h)[None, :]   # (1, D)

    attn_w = jnp.concatenate([a_h, wvo_h], axis=0).astype(jnp.bfloat16)    # (2H, D, D)
    ukT = uk.astype(jnp.bfloat16)                                          # (H, D)

    wc_g = params["wc"].reshape(D, 6, D).transpose(1, 0, 2)    # (6, D, D)
    bc_g = params["bc"].reshape(6, 1, D)
    wc_aug = jnp.concatenate([wc_g, bc_g], axis=1).astype(jnp.bfloat16)    # (6, D+1, D)

    w1_aug = jnp.concatenate([params["w1"], params["b1"]], axis=0).astype(jnp.bfloat16)
    w2_aug = jnp.concatenate([params["w2"], params["b2"]], axis=0).astype(jnp.bfloat16)

    vecs = jnp.concatenate([params["ln1_g"], params["ln1_b"],
                            params["ln2_g"], params["ln2_b"],
                            b_attn, jnp.zeros((3, D), jnp.float32)], axis=0)  # (8, D) f32
    return attn_w, ukT, wc_aug, w1_aug, w2_aug, vecs


def transformer_cross_attention(q, k, v, pad_mask, attn_bias, cond, params):
    attn_w, ukT, wc_aug, w1_aug, w2_aug, vecs = fold_weights(params)

    q_flat = q.reshape(B * T, D)                          # f32 (residual / LN precision)
    kt = k.transpose(0, 2, 1).astype(jnp.bfloat16)        # (B, D, S)
    v_flat = v.reshape(B * S, D).astype(jnp.bfloat16)     # (B*S, D)
    cond3 = cond.reshape(B, 1, D)

    # per-batch additive mask: key padding + additive attn bias
    pad = pad_mask.reshape(B, S)
    mask = (jnp.where(pad[:, None, :] > 0.5, NEG, 0.0).astype(jnp.float32)
            + attn_bias[None, :, :])                      # (B, T, S)
    mask_flat = mask.reshape(B * T, S)

    out_flat = pl.pallas_call(
        cross_attn_kernel,
        out_shape=jax.ShapeDtypeStruct((B * T, D), jnp.float32),
        grid=(B,),
        in_specs=[
            pl.BlockSpec((T, D), lambda b: (b, 0)),            # q rows
            pl.BlockSpec((1, D, S), lambda b: (b, 0, 0)),      # k (pre-transposed)
            pl.BlockSpec((S, D), lambda b: (b, 0)),            # v rows
            pl.BlockSpec((T, S), lambda b: (b, 0)),            # additive mask
            pl.BlockSpec((1, 1, D), lambda b: (b, 0, 0)),      # cond
            pl.BlockSpec((2 * H, D, D), lambda b: (0, 0, 0)),  # folded attn weights
            pl.BlockSpec((H, D), lambda b: (0, 0)),            # k-side score bias proj
            pl.BlockSpec((6, D + 1, D), lambda b: (0, 0, 0)),  # cond_mlp weights (+bias row)
            pl.BlockSpec((D + 1, FF), lambda b: (0, 0)),       # fc1 (+bias row)
            pl.BlockSpec((FF + 1, D), lambda b: (0, 0)),       # fc2 (+bias row)
            pl.BlockSpec((8, D), lambda b: (0, 0)),            # LN params + attn out bias
        ],
        out_specs=pl.BlockSpec((T, D), lambda b: (b, 0)),
        compiler_params=pltpu.CompilerParams(
            dimension_semantics=("parallel",)),
    )(q_flat, kt, v_flat, mask_flat, cond3,
      attn_w, ukT, wc_aug, w1_aug, w2_aug, vecs)
    return out_flat.reshape(B, T, D)


# --------------------------- pure-JAX reference -------------------------------
def reference(q, k, v, pad_mask, attn_bias, cond, p):
    residual = q
    c = cond * jax.nn.sigmoid(cond)
    cm = c @ p["wc"] + p["bc"]
    shift_msa, scale_msa, gate_msa, shift_mlp, scale_mlp, gate_mlp = jnp.split(cm, 6, axis=-1)

    qn = _ln(q, p["ln1_g"], p["ln1_b"])
    qm = qn * (1.0 + scale_msa) + shift_msa
    scaling = float(HD) ** -0.5
    qp = (qm @ p["wq"] + p["bq"]) * scaling
    kp = k @ p["wk"] + p["bk"]
    vp = v @ p["wv"] + p["bv"]
    qh = qp.reshape(B, T, H, HD).transpose(0, 2, 1, 3)
    kh = kp.reshape(B, S, H, HD).transpose(0, 2, 1, 3)
    vh = vp.reshape(B, S, H, HD).transpose(0, 2, 1, 3)
    s = jnp.einsum("bhtd,bhsd->bhts", qh, kh)
    s = jnp.where(pad_mask[:, None, :, :] > 0.5, NEG, s)
    s = s + attn_bias[None, None]
    w = jax.nn.softmax(s, axis=-1)
    o = jnp.einsum("bhts,bhsd->bhtd", w, vh).transpose(0, 2, 1, 3).reshape(B, T, D)
    o = o @ p["wo"] + p["bo"]
    x = gate_msa * o + residual
    residual2 = x
    xn = _ln(x, p["ln2_g"], p["ln2_b"])
    xm = xn * (1.0 + scale_mlp) + shift_mlp
    hdn = jax.nn.relu(xm @ p["w1"] + p["b1"])
    y = hdn @ p["w2"] + p["b2"]
    return gate_mlp * y + residual2


# ------------------------------ main -------------------------------------------
if __name__ == "__main__":
    key = jax.random.PRNGKey(0)
    ks = jax.random.split(key, 20)

    q = jax.random.normal(ks[0], (B, T, D), jnp.float32)
    k = jax.random.normal(ks[1], (B, S, D), jnp.float32)
    v = jax.random.normal(ks[2], (B, S, D), jnp.float32)
    cond = jax.random.normal(ks[3], (B, 1, D), jnp.float32)

    # pad the last two key positions of batch element 1
    pad_bool = jnp.zeros((B, S), dtype=bool).at[1, S - 2:].set(True)
    pad_mask = pad_bool.astype(jnp.float32).reshape(B, 1, S)
    attn_bias = jnp.zeros((T, S), jnp.float32)            # attn_mask = None

    def w(kk, shape, scale=0.05):
        return scale * jax.random.normal(kk, shape, jnp.float32)

    params = {
        "ln1_g": jnp.ones((1, D), jnp.float32), "ln1_b": jnp.zeros((1, D), jnp.float32),
        "wq": w(ks[4], (D, D)), "bq": w(ks[5], (1, D)),
        "wk": w(ks[6], (D, D)), "bk": w(ks[7], (1, D)),
        "wv": w(ks[8], (D, D)), "bv": w(ks[9], (1, D)),
        "wo": w(ks[10], (D, D)), "bo": w(ks[11], (1, D)),
        "ln2_g": jnp.ones((1, D), jnp.float32), "ln2_b": jnp.zeros((1, D), jnp.float32),
        "w1": w(ks[12], (D, FF)), "b1": w(ks[13], (1, FF)),
        "w2": w(ks[14], (FF, D)), "b2": w(ks[15], (1, D)),
        "wc": w(ks[16], (D, 6 * D)), "bc": w(ks[17], (1, 6 * D)),
    }

    out = transformer_cross_attention(q, k, v, pad_mask, attn_bias, cond, params)
    out = jax.block_until_ready(out)

    ref = reference(q, k, v, pad_mask, attn_bias, cond, params)
    assert out.shape == (B, T, D)
    err = jnp.max(jnp.abs(out - ref))
    assert jnp.allclose(out, ref, rtol=1e-2, atol=1e-2), f"max abs err = {err}"

    print("KERNEL_OK")
</pallas_src>

<mosaic_0001>
module attributes {stable_mosaic.version = 11 : i64} {
  func.func @cross_attn_kernel(%arg0: i32, %arg1: memref<8x32xf32, #tpu.memory_space<vmem>>, %arg2: memref<1x32x8xbf16, #tpu.memory_space<vmem>>, %arg3: memref<8x32xbf16, #tpu.memory_space<vmem>>, %arg4: memref<8x8xf32, #tpu.memory_space<vmem>>, %arg5: memref<1x1x32xf32, #tpu.memory_space<vmem>>, %arg6: memref<16x32x32xbf16, #tpu.memory_space<vmem>>, %arg7: memref<8x32xbf16, #tpu.memory_space<vmem>>, %arg8: memref<6x33x32xbf16, #tpu.memory_space<vmem>>, %arg9: memref<33x64xbf16, #tpu.memory_space<vmem>>, %arg10: memref<65x32xbf16, #tpu.memory_space<vmem>>, %arg11: memref<8x32xf32, #tpu.memory_space<vmem>>, %arg12: memref<8x32xf32, #tpu.memory_space<vmem>>) attributes {dimension_semantics = [#tpu.dimension_semantics<parallel>], iteration_bounds = array<i64: 2>, scalar_prefetch = 0 : i64, scratch_operands = 0 : i64, tpu.core_type = #tpu.core_type<tc>, window_params = [{transform_indices = @transform_0, window_bounds = array<i64: 8, 32>}, {transform_indices = @transform_1, window_bounds = array<i64: 1, 32, 8>}, {transform_indices = @transform_2, window_bounds = array<i64: 8, 32>}, {transform_indices = @transform_3, window_bounds = array<i64: 8, 8>}, {transform_indices = @transform_4, window_bounds = array<i64: 1, 1, 32>}, {pipeline_mode = #tpu.pipeline_mode<synchronous>, transform_indices = @transform_5, window_bounds = array<i64: 16, 32, 32>}, {pipeline_mode = #tpu.pipeline_mode<synchronous>, transform_indices = @transform_6, window_bounds = array<i64: 8, 32>}, {pipeline_mode = #tpu.pipeline_mode<synchronous>, transform_indices = @transform_7, window_bounds = array<i64: 6, 33, 32>}, {pipeline_mode = #tpu.pipeline_mode<synchronous>, transform_indices = @transform_8, window_bounds = array<i64: 33, 64>}, {pipeline_mode = #tpu.pipeline_mode<synchronous>, transform_indices = @transform_9, window_bounds = array<i64: 65, 32>}, {pipeline_mode = #tpu.pipeline_mode<synchronous>, transform_indices = @transform_10, window_bounds = array<i64: 8, 32>}, {transform_indices = @transform_11, window_bounds = array<i64: 8, 32>}]} {
    %c0 = arith.constant 0 : index
    %c0_0 = arith.constant 0 : index
    %0 = vector.load %arg1[%c0, %c0_0] : memref<8x32xf32, #tpu.memory_space<vmem>>, vector<8x32xf32>
    %c0_1 = arith.constant 0 : index
    %c0_2 = arith.constant 0 : index
    %c0_3 = arith.constant 0 : index
    %1 = vector.load %arg2[%c0_1, %c0_2, %c0_3] : memref<1x32x8xbf16, #tpu.memory_space<vmem>>, vector<1x32x8xbf16>
    %2 = vector.shape_cast %1 : vector<1x32x8xbf16> to vector<32x8xbf16>
    %c0_4 = arith.constant 0 : index
    %c0_5 = arith.constant 0 : index
    %3 = vector.load %arg3[%c0_4, %c0_5] : memref<8x32xbf16, #tpu.memory_space<vmem>>, vector<8x32xbf16>
    %c0_6 = arith.constant 0 : index
    %c0_7 = arith.constant 0 : index
    %4 = vector.load %arg4[%c0_6, %c0_7] : memref<8x8xf32, #tpu.memory_space<vmem>>, vector<8x8xf32>
    %c0_8 = arith.constant 0 : index
    %c0_9 = arith.constant 0 : index
    %c0_10 = arith.constant 0 : index
    %5 = vector.load %arg5[%c0_8, %c0_9, %c0_10] : memref<1x1x32xf32, #tpu.memory_space<vmem>>, vector<1x1x32xf32>
    %6 = vector.shape_cast %5 : vector<1x1x32xf32> to vector<1x32xf32>
    %c0_11 = arith.constant 0 : index
    %c0_12 = arith.constant 0 : index
    %7 = vector.load %arg11[%c0_11, %c0_12] : memref<8x32xf32, #tpu.memory_space<vmem>>, vector<1x32xf32>
    %c1 = arith.constant 1 : index
    %c0_13 = arith.constant 0 : index
    %8 = vector.load %arg11[%c1, %c0_13] : memref<8x32xf32, #tpu.memory_space<vmem>>, vector<1x32xf32>
    %c2 = arith.constant 2 : index
    %c0_14 = arith.constant 0 : index
    %9 = vector.load %arg11[%c2, %c0_14] : memref<8x32xf32, #tpu.memory_space<vmem>>, vector<1x32xf32>
    %c3 = arith.constant 3 : index
    %c0_15 = arith.constant 0 : index
    %10 = vector.load %arg11[%c3, %c0_15] : memref<8x32xf32, #tpu.memory_space<vmem>>, vector<1x32xf32>
    %c4 = arith.constant 4 : index
    %c0_16 = arith.constant 0 : index
    %11 = vector.load %arg11[%c4, %c0_16] : memref<8x32xf32, #tpu.memory_space<vmem>>, vector<1x32xf32>
    %12 = arith.negf %6 : vector<1x32xf32>
    %13 = math.exp %12 : vector<1x32xf32>
    %cst = arith.constant 1.000000e+00 : f32
    %14 = vector.broadcast %cst : f32 to vector<1x32xf32>
    %15 = arith.addf %14, %13 : vector<1x32xf32>
    %16 = arith.divf %14, %15 : vector<1x32xf32>
    %17 = arith.mulf %6, %16 : vector<1x32xf32>
    %18 = arith.truncf %17 : vector<1x32xf32> to vector<1x32xbf16>
    %c0_17 = arith.constant 0 : index
    %c0_18 = arith.constant 0 : index
    %c0_19 = arith.constant 0 : index
    %19 = vector.load %arg8[%c0_17, %c0_18, %c0_19] : memref<6x33x32xbf16, #tpu.memory_space<vmem>>, vector<1x32x32xbf16>
    %20 = vector.shape_cast %19 : vector<1x32x32xbf16> to vector<32x32xbf16>
    %cst_20 = arith.constant dense<0.000000e+00> : vector<1x32xf32>
    %21 = tpu.matmul %18, %20, %cst_20 {dimension_numbers = #tpu.dot_dimension_numbers<[1], [0], [0], [1], [0, 0, 1, 1], [], []>} : vector<1x32xbf16>, vector<32x32xbf16>, vector<1x32xf32> -> vector<1x32xf32>
    %c0_21 = arith.constant 0 : index
    %c32 = arith.constant 32 : index
    %c0_22 = arith.constant 0 : index
    %22 = vector.load %arg8[%c0_21, %c32, %c0_22] : memref<6x33x32xbf16, #tpu.memory_space<vmem>>, vector<1x1x32xbf16>
    %23 = vector.shape_cast %22 : vector<1x1x32xbf16> to vector<1x32xbf16>
    %24 = arith.extf %23 : vector<1x32xbf16> to vector<1x32xf32>
    %25 = arith.addf %21, %24 : vector<1x32xf32>
    %c1_23 = arith.constant 1 : index
    %c0_24 = arith.constant 0 : index
    %c0_25 = arith.constant 0 : index
    %26 = vector.load %arg8[%c1_23, %c0_24, %c0_25] : memref<6x33x32xbf16, #tpu.memory_space<vmem>>, vector<1x32x32xbf16>
    %27 = vector.shape_cast %26 : vector<1x32x32xbf16> to vector<32x32xbf16>
    %cst_26 = arith.constant dense<0.000000e+00> : vector<1x32xf32>
    %28 = tpu.matmul %18, %27, %cst_26 {dimension_numbers = #tpu.dot_dimension_numbers<[1], [0], [0], [1], [0, 0, 1, 1], [], []>} : vector<1x32xbf16>, vector<32x32xbf16>, vector<1x32xf32> -> vector<1x32xf32>
    %c1_27 = arith.constant 1 : index
    %c32_28 = arith.constant 32 : index
    %c0_29 = arith.constant 0 : index
    %29 = vector.load %arg8[%c1_27, %c32_28, %c0_29] : memref<6x33x32xbf16, #tpu.memory_space<vmem>>, vector<1x1x32xbf16>
    %30 = vector.shape_cast %29 : vector<1x1x32xbf16> to vector<1x32xbf16>
    %31 = arith.extf %30 : vector<1x32xbf16> to vector<1x32xf32>
    %32 = arith.addf %28, %31 : vector<1x32xf32>
    %c2_30 = arith.constant 2 : index
    %c0_31 = arith.constant 0 : index
    %c0_32 = arith.constant 0 : index
    %33 = vector.load %arg8[%c2_30, %c0_31, %c0_32] : memref<6x33x32xbf16, #tpu.memory_space<vmem>>, vector<1x32x32xbf16>
    %34 = vector.shape_cast %33 : vector<1x32x32xbf16> to vector<32x32xbf16>
    %cst_33 = arith.constant dense<0.000000e+00> : vector<1x32xf32>
    %35 = tpu.matmul %18, %34, %cst_33 {dimension_numbers = #tpu.dot_dimension_numbers<[1], [0], [0], [1], [0, 0, 1, 1], [], []>} : vector<1x32xbf16>, vector<32x32xbf16>, vector<1x32xf32> -> vector<1x32xf32>
    %c2_34 = arith.constant 2 : index
    %c32_35 = arith.constant 32 : index
    %c0_36 = arith.constant 0 : index
    %36 = vector.load %arg8[%c2_34, %c32_35, %c0_36] : memref<6x33x32xbf16, #tpu.memory_space<vmem>>, vector<1x1x32xbf16>
    %37 = vector.shape_cast %36 : vector<1x1x32xbf16> to vector<1x32xbf16>
    %38 = arith.extf %37 : vector<1x32xbf16> to vector<1x32xf32>
    %39 = arith.addf %35, %38 : vector<1x32xf32>
    %c3_37 = arith.constant 3 : index
    %c0_38 = arith.constant 0 : index
    %c0_39 = arith.constant 0 : index
    %40 = vector.load %arg8[%c3_37, %c0_38, %c0_39] : memref<6x33x32xbf16, #tpu.memory_space<vmem>>, vector<1x32x32xbf16>
    %41 = vector.shape_cast %40 : vector<1x32x32xbf16> to vector<32x32xbf16>
    %cst_40 = arith.constant dense<0.000000e+00> : vector<1x32xf32>
    %42 = tpu.matmul %18, %41, %cst_40 {dimension_numbers = #tpu.dot_dimension_numbers<[1], [0], [0], [1], [0, 0, 1, 1], [], []>} : vector<1x32xbf16>, vector<32x32xbf16>, vector<1x32xf32> -> vector<1x32xf32>
    %c3_41 = arith.constant 3 : index
    %c32_42 = arith.constant 32 : index
    %c0_43 = arith.constant 0 : index
    %43 = vector.load %arg8[%c3_41, %c32_42, %c0_43] : memref<6x33x32xbf16, #tpu.memory_space<vmem>>, vector<1x1x32xbf16>
    %44 = vector.shape_cast %43 : vector<1x1x32xbf16> to vector<1x32xbf16>
    %45 = arith.extf %44 : vector<1x32xbf16> to vector<1x32xf32>
    %46 = arith.addf %42, %45 : vector<1x32xf32>
    %c4_44 = arith.constant 4 : index
    %c0_45 = arith.constant 0 : index
    %c0_46 = arith.constant 0 : index
    %47 = vector.load %arg8[%c4_44, %c0_45, %c0_46] : memref<6x33x32xbf16, #tpu.memory_space<vmem>>, vector<1x32x32xbf16>
    %48 = vector.shape_cast %47 : vector<1x32x32xbf16> to vector<32x32xbf16>
    %cst_47 = arith.constant dense<0.000000e+00> : vector<1x32xf32>
    %49 = tpu.matmul %18, %48, %cst_47 {dimension_numbers = #tpu.dot_dimension_numbers<[1], [0], [0], [1], [0, 0, 1, 1], [], []>} : vector<1x32xbf16>, vector<32x32xbf16>, vector<1x32xf32> -> vector<1x32xf32>
    %c4_48 = arith.constant 4 : index
    %c32_49 = arith.constant 32 : index
    %c0_50 = arith.constant 0 : index
    %50 = vector.load %arg8[%c4_48, %c32_49, %c0_50] : memref<6x33x32xbf16, #tpu.memory_space<vmem>>, vector<1x1x32xbf16>
    %51 = vector.shape_cast %50 : vector<1x1x32xbf16> to vector<1x32xbf16>
    %52 = arith.extf %51 : vector<1x32xbf16> to vector<1x32xf32>
    %53 = arith.addf %49, %52 : vector<1x32xf32>
    %c5 = arith.constant 5 : index
    %c0_51 = arith.constant 0 : index
    %c0_52 = arith.constant 0 : index
    %54 = vector.load %arg8[%c5, %c0_51, %c0_52] : memref<6x33x32xbf16, #tpu.memory_space<vmem>>, vector<1x32x32xbf16>
    %55 = vector.shape_cast %54 : vector<1x32x32xbf16> to vector<32x32xbf16>
    %cst_53 = arith.constant dense<0.000000e+00> : vector<1x32xf32>
    %56 = tpu.matmul %18, %55, %cst_53 {dimension_numbers = #tpu.dot_dimension_numbers<[1], [0], [0], [1], [0, 0, 1, 1], [], []>} : vector<1x32xbf16>, vector<32x32xbf16>, vector<1x32xf32> -> vector<1x32xf32>
    %c5_54 = arith.constant 5 : index
    %c32_55 = arith.constant 32 : index
    %c0_56 = arith.constant 0 : index
    %57 = vector.load %arg8[%c5_54, %c32_55, %c0_56] : memref<6x33x32xbf16, #tpu.memory_space<vmem>>, vector<1x1x32xbf16>
    %58 = vector.shape_cast %57 : vector<1x1x32xbf16> to vector<1x32xbf16>
    %59 = arith.extf %58 : vector<1x32xbf16> to vector<1x32xf32>
    %60 = arith.addf %56, %59 : vector<1x32xf32>
    %cst_57 = arith.constant dense<0.000000e+00> : vector<8xf32>
    %61 = vector.multi_reduction <add>, %0, %cst_57 [1] : vector<8x32xf32> to vector<8xf32>
    %62 = vector.shape_cast %61 : vector<8xf32> to vector<8x1xf32>
    %cst_58 = arith.constant 3.200000e+01 : f32
    %63 = vector.broadcast %cst_58 : f32 to vector<8x1xf32>
    %64 = arith.divf %62, %63 : vector<8x1xf32>
    %65 = vector.broadcast %64 : vector<8x1xf32> to vector<8x32xf32>
    %66 = arith.subf %0, %65 : vector<8x32xf32>
    %67 = arith.mulf %66, %66 : vector<8x32xf32>
    %cst_59 = arith.constant dense<0.000000e+00> : vector<8xf32>
    %68 = vector.multi_reduction <add>, %67, %cst_59 [1] : vector<8x32xf32> to vector<8xf32>
    %69 = vector.shape_cast %68 : vector<8xf32> to vector<8x1xf32>
    %cst_60 = arith.constant 3.200000e+01 : f32
    %70 = vector.broadcast %cst_60 : f32 to vector<8x1xf32>
    %71 = arith.divf %69, %70 : vector<8x1xf32>
    %72 = vector.broadcast %64 : vector<8x1xf32> to vector<8x32xf32>
    %73 = arith.subf %0, %72 : vector<8x32xf32>
    %cst_61 = arith.constant 9.99999974E-6 : f32
    %74 = vector.broadcast %cst_61 : f32 to vector<8x1xf32>
    %75 = arith.addf %71, %74 : vector<8x1xf32>
    %76 = math.rsqrt %75 : vector<8x1xf32>
    %77 = vector.broadcast %76 : vector<8x1xf32> to vector<8x32xf32>
    %78 = arith.mulf %73, %77 : vector<8x32xf32>
    %79 = vector.broadcast %7 : vector<1x32xf32> to vector<8x32xf32>
    %80 = arith.mulf %78, %79 : vector<8x32xf32>
    %81 = vector.broadcast %8 : vector<1x32xf32> to vector<8x32xf32>
    %82 = arith.addf %80, %81 : vector<8x32xf32>
    %cst_62 = arith.constant 1.000000e+00 : f32
    %83 = vector.broadcast %cst_62 : f32 to vector<1x32xf32>
    %84 = arith.addf %83, %32 : vector<1x32xf32>
    %85 = vector.broadcast %84 : vector<1x32xf32> to vector<8x32xf32>
    %86 = arith.mulf %82, %85 : vector<8x32xf32>
    %87 = vector.broadcast %25 : vector<1x32xf32> to vector<8x32xf32>
    %88 = arith.addf %86, %87 : vector<8x32xf32>
    %89 = arith.truncf %88 : vector<8x32xf32> to vector<8x32xbf16>
    %c0_63 = arith.constant 0 : index
    %c0_64 = arith.constant 0 : index
    %90 = vector.load %arg7[%c0_63, %c0_64] : memref<8x32xbf16, #tpu.memory_space<vmem>>, vector<8x32xbf16>
    %cst_65 = arith.constant dense<0.000000e+00> : vector<8x8xf32>
    %91 = tpu.matmul %90, %2, %cst_65 {dimension_numbers = #tpu.dot_dimension_numbers<[1], [0], [0], [1], [0, 0, 1, 1], [], []>} : vector<8x32xbf16>, vector<32x8xbf16>, vector<8x8xf32> -> vector<8x8xf32>
    %c0_66 = arith.constant 0 : index
    %c0_67 = arith.constant 0 : index
    %c0_68 = arith.constant 0 : index
    %92 = vector.load %arg6[%c0_66, %c0_67, %c0_68] : memref<16x32x32xbf16, #tpu.memory_space<vmem>>, vector<1x32x32xbf16>
    %93 = vector.shape_cast %92 : vector<1x32x32xbf16> to vector<32x32xbf16>
    %cst_69 = arith.constant dense<0.000000e+00> : vector<8x32xf32>
    %94 = tpu.matmul %89, %93, %cst_69 {dimension_numbers = #tpu.dot_dimension_numbers<[1], [0], [0], [1], [0, 0, 1, 1], [], []>} : vector<8x32xbf16>, vector<32x32xbf16>, vector<8x32xf32> -> vector<8x32xf32>
    %95 = arith.truncf %94 : vector<8x32xf32> to vector<8x32xbf16>
    %cst_70 = arith.constant dense<0.000000e+00> : vector<8x8xf32>
    %96 = tpu.matmul %95, %2, %cst_70 {dimension_numbers = #tpu.dot_dimension_numbers<[1], [0], [0], [1], [0, 0, 1, 1], [], []>} : vector<8x32xbf16>, vector<32x8xbf16>, vector<8x8xf32> -> vector<8x8xf32>
    %97 = vector.extract_strided_slice %91 {offsets = [0, 0], sizes = [1, 8], strides = [1, 1]} : vector<8x8xf32> to vector<1x8xf32>
    %98 = vector.broadcast %97 : vector<1x8xf32> to vector<8x8xf32>
    %99 = arith.addf %96, %98 : vector<8x8xf32>
    %100 = arith.addf %99, %4 : vector<8x8xf32>
    %cst_71 = arith.constant dense<0xFF800000> : vector<8xf32>
    %101 = vector.multi_reduction <maximumf>, %100, %cst_71 [1] : vector<8x8xf32> to vector<8xf32>
    %102 = vector.shape_cast %101 : vector<8xf32> to vector<8x1xf32>
    %103 = vector.broadcast %102 : vector<8x1xf32> to vector<8x8xf32>
    %104 = arith.subf %100, %103 : vector<8x8xf32>
    %105 = math.exp %104 : vector<8x8xf32>
    %cst_72 = arith.constant dense<0.000000e+00> : vector<8xf32>
    %106 = vector.multi_reduction <add>, %105, %cst_72 [1] : vector<8x8xf32> to vector<8xf32>
    %107 = vector.shape_cast %106 : vector<8xf32> to vector<8x1xf32>
    %108 = tpu.reciprocal %107 {approx = true} : vector<8x1xf32> -> vector<8x1xf32>
    %109 = vector.broadcast %108 : vector<8x1xf32> to vector<8x8xf32>
    %110 = arith.mulf %105, %109 : vector<8x8xf32>
    %c8 = arith.constant 8 : index
    %c0_73 = arith.constant 0 : index
    %c0_74 = arith.constant 0 : index
    %111 = vector.load %arg6[%c8, %c0_73, %c0_74] : memref<16x32x32xbf16, #tpu.memory_space<vmem>>, vector<1x32x32xbf16>
    %112 = vector.shape_cast %111 : vector<1x32x32xbf16> to vector<32x32xbf16>
    %cst_75 = arith.constant dense<0.000000e+00> : vector<8x32xf32>
    %113 = tpu.matmul %3, %112, %cst_75 {dimension_numbers = #tpu.dot_dimension_numbers<[1], [0], [0], [1], [0, 0, 1, 1], [], []>} : vector<8x32xbf16>, vector<32x32xbf16>, vector<8x32xf32> -> vector<8x32xf32>
    %114 = arith.truncf %110 : vector<8x8xf32> to vector<8x8xbf16>
    %115 = arith.truncf %113 : vector<8x32xf32> to vector<8x32xbf16>
    %cst_76 = arith.constant dense<0.000000e+00> : vector<8x32xf32>
    %116 = tpu.matmul %114, %115, %cst_76 {dimension_numbers = #tpu.dot_dimension_numbers<[1], [0], [0], [1], [0, 0, 1, 1], [], []>} : vector<8x8xbf16>, vector<8x32xbf16>, vector<8x32xf32> -> vector<8x32xf32>
    %c1_77 = arith.constant 1 : index
    %c0_78 = arith.constant 0 : index
    %c0_79 = arith.constant 0 : index
    %117 = vector.load %arg6[%c1_77, %c0_78, %c0_79] : memref<16x32x32xbf16, #tpu.memory_space<vmem>>, vector<1x32x32xbf16>
    %118 = vector.shape_cast %117 : vector<1x32x32xbf16> to vector<32x32xbf16>
    %cst_80 = arith.constant dense<0.000000e+00> : vector<8x32xf32>
    %119 = tpu.matmul %89, %118, %cst_80 {dimension_numbers = #tpu.dot_dimension_numbers<[1], [0], [0], [1], [0, 0, 1, 1], [], []>} : vector<8x32xbf16>, vector<32x32xbf16>, vector<8x32xf32> -> vector<8x32xf32>
    %120 = arith.truncf %119 : vector<8x32xf32> to vector<8x32xbf16>
    %cst_81 = arith.constant dense<0.000000e+00> : vector<8x8xf32>
    %121 = tpu.matmul %120, %2, %cst_81 {dimension_numbers = #tpu.dot_dimension_numbers<[1], [0], [0], [1], [0, 0, 1, 1], [], []>} : vector<8x32xbf16>, vector<32x8xbf16>, vector<8x8xf32> -> vector<8x8xf32>
    %122 = vector.extract_strided_slice %91 {offsets = [1, 0], sizes = [1, 8], strides = [1, 1]} : vector<8x8xf32> to vector<1x8xf32>
    %123 = vector.broadcast %122 : vector<1x8xf32> to vector<8x8xf32>
    %124 = arith.addf %121, %123 : vector<8x8xf32>
    %125 = arith.addf %124, %4 : vector<8x8xf32>
    %cst_82 = arith.constant dense<0xFF800000> : vector<8xf32>
    %126 = vector.multi_reduction <maximumf>, %125, %cst_82 [1] : vector<8x8xf32> to vector<8xf32>
    %127 = vector.shape_cast %126 : vector<8xf32> to vector<8x1xf32>
    %128 = vector.broadcast %127 : vector<8x1xf32> to vector<8x8xf32>
    %129 = arith.subf %125, %128 : vector<8x8xf32>
    %130 = math.exp %129 : vector<8x8xf32>
    %cst_83 = arith.constant dense<0.000000e+00> : vector<8xf32>
    %131 = vector.multi_reduction <add>, %130, %cst_83 [1] : vector<8x8xf32> to vector<8xf32>
    %132 = vector.shape_cast %131 : vector<8xf32> to vector<8x1xf32>
    %133 = tpu.reciprocal %132 {approx = true} : vector<8x1xf32> -> vector<8x1xf32>
    %134 = vector.broadcast %133 : vector<8x1xf32> to vector<8x8xf32>
    %135 = arith.mulf %130, %134 : vector<8x8xf32>
    %c9 = arith.constant 9 : index
    %c0_84 = arith.constant 0 : index
    %c0_85 = arith.constant 0 : index
    %136 = vector.load %arg6[%c9, %c0_84, %c0_85] : memref<16x32x32xbf16, #tpu.memory_space<vmem>>, vector<1x32x32xbf16>
    %137 = vector.shape_cast %136 : vector<1x32x32xbf16> to vector<32x32xbf16>
    %cst_86 = arith.constant dense<0.000000e+00> : vector<8x32xf32>
    %138 = tpu.matmul %3, %137, %cst_86 {dimension_numbers = #tpu.dot_dimension_numbers<[1], [0], [0], [1], [0, 0, 1, 1], [], []>} : vector<8x32xbf16>, vector<32x32xbf16>, vector<8x32xf32> -> vector<8x32xf32>
    %139 = arith.truncf %135 : vector<8x8xf32> to vector<8x8xbf16>
    %140 = arith.truncf %138 : vector<8x32xf32> to vector<8x32xbf16>
    %cst_87 = arith.constant dense<0.000000e+00> : vector<8x32xf32>
    %141 = tpu.matmul %139, %140, %cst_87 {dimension_numbers = #tpu.dot_dimension_numbers<[1], [0], [0], [1], [0, 0, 1, 1], [], []>} : vector<8x8xbf16>, vector<8x32xbf16>, vector<8x32xf32> -> vector<8x32xf32>
    %c2_88 = arith.constant 2 : index
    %c0_89 = arith.constant 0 : index
    %c0_90 = arith.constant 0 : index
    %142 = vector.load %arg6[%c2_88, %c0_89, %c0_90] : memref<16x32x32xbf16, #tpu.memory_space<vmem>>, vector<1x32x32xbf16>
    %143 = vector.shape_cast %142 : vector<1x32x32xbf16> to vector<32x32xbf16>
    %cst_91 = arith.constant dense<0.000000e+00> : vector<8x32xf32>
    %144 = tpu.matmul %89, %143, %cst_91 {dimension_numbers = #tpu.dot_dimension_numbers<[1], [0], [0], [1], [0, 0, 1, 1], [], []>} : vector<8x32xbf16>, vector<32x32xbf16>, vector<8x32xf32> -> vector<8x32xf32>
    %145 = arith.truncf %144 : vector<8x32xf32> to vector<8x32xbf16>
    %cst_92 = arith.constant dense<0.000000e+00> : vector<8x8xf32>
    %146 = tpu.matmul %145, %2, %cst_92 {dimension_numbers = #tpu.dot_dimension_numbers<[1], [0], [0], [1], [0, 0, 1, 1], [], []>} : vector<8x32xbf16>, vector<32x8xbf16>, vector<8x8xf32> -> vector<8x8xf32>
    %147 = vector.extract_strided_slice %91 {offsets = [2, 0], sizes = [1, 8], strides = [1, 1]} : vector<8x8xf32> to vector<1x8xf32>
    %148 = vector.broadcast %147 : vector<1x8xf32> to vector<8x8xf32>
    %149 = arith.addf %146, %148 : vector<8x8xf32>
    %150 = arith.addf %149, %4 : vector<8x8xf32>
    %cst_93 = arith.constant dense<0xFF800000> : vector<8xf32>
    %151 = vector.multi_reduction <maximumf>, %150, %cst_93 [1] : vector<8x8xf32> to vector<8xf32>
    %152 = vector.shape_cast %151 : vector<8xf32> to vector<8x1xf32>
    %153 = vector.broadcast %152 : vector<8x1xf32> to vector<8x8xf32>
    %154 = arith.subf %150, %153 : vector<8x8xf32>
    %155 = math.exp %154 : vector<8x8xf32>
    %cst_94 = arith.constant dense<0.000000e+00> : vector<8xf32>
    %156 = vector.multi_reduction <add>, %155, %cst_94 [1] : vector<8x8xf32> to vector<8xf32>
    %157 = vector.shape_cast %156 : vector<8xf32> to vector<8x1xf32>
    %158 = tpu.reciprocal %157 {approx = true} : vector<8x1xf32> -> vector<8x1xf32>
    %159 = vector.broadcast %158 : vector<8x1xf32> to vector<8x8xf32>
    %160 = arith.mulf %155, %159 : vector<8x8xf32>
    %c10 = arith.constant 10 : index
    %c0_95 = arith.constant 0 : index
    %c0_96 = arith.constant 0 : index
    %161 = vector.load %arg6[%c10, %c0_95, %c0_96] : memref<16x32x32xbf16, #tpu.memory_space<vmem>>, vector<1x32x32xbf16>
    %162 = vector.shape_cast %161 : vector<1x32x32xbf16> to vector<32x32xbf16>
    %cst_97 = arith.constant dense<0.000000e+00> : vector<8x32xf32>
    %163 = tpu.matmul %3, %162, %cst_97 {dimension_numbers = #tpu.dot_dimension_numbers<[1], [0], [0], [1], [0, 0, 1, 1], [], []>} : vector<8x32xbf16>, vector<32x32xbf16>, vector<8x32xf32> -> vector<8x32xf32>
    %164 = arith.truncf %160 : vector<8x8xf32> to vector<8x8xbf16>
    %165 = arith.truncf %163 : vector<8x32xf32> to vector<8x32xbf16>
    %cst_98 = arith.constant dense<0.000000e+00> : vector<8x32xf32>
    %166 = tpu.matmul %164, %165, %cst_98 {dimension_numbers = #tpu.dot_dimension_numbers<[1], [0], [0], [1], [0, 0, 1, 1], [], []>} : vector<8x8xbf16>, vector<8x32xbf16>, vector<8x32xf32> -> vector<8x32xf32>
    %c3_99 = arith.constant 3 : index
    %c0_100 = arith.constant 0 : index
    %c0_101 = arith.constant 0 : index
    %167 = vector.load %arg6[%c3_99, %c0_100, %c0_101] : memref<16x32x32xbf16, #tpu.memory_space<vmem>>, vector<1x32x32xbf16>
    %168 = vector.shape_cast %167 : vector<1x32x32xbf16> to vector<32x32xbf16>
    %cst_102 = arith.constant dense<0.000000e+00> : vector<8x32xf32>
    %169 = tpu.matmul %89, %168, %cst_102 {dimension_numbers = #tpu.dot_dimension_numbers<[1], [0], [0], [1], [0, 0, 1, 1], [], []>} : vector<8x32xbf16>, vector<32x32xbf16>, vector<8x32xf32> -> vector<8x32xf32>
    %170 = arith.truncf %169 : vector<8x32xf32> to vector<8x32xbf16>
    %cst_103 = arith.constant dense<0.000000e+00> : vector<8x8xf32>
    %171 = tpu.matmul %170, %2, %cst_103 {dimension_numbers = #tpu.dot_dimension_numbers<[1], [0], [0], [1], [0, 0, 1, 1], [], []>} : vector<8x32xbf16>, vector<32x8xbf16>, vector<8x8xf32> -> vector<8x8xf32>
    %172 = vector.extract_strided_slice %91 {offsets = [3, 0], sizes = [1, 8], strides = [1, 1]} : vector<8x8xf32> to vector<1x8xf32>
    %173 = vector.broadcast %172 : vector<1x8xf32> to vector<8x8xf32>
    %174 = arith.addf %171, %173 : vector<8x8xf32>
    %175 = arith.addf %174, %4 : vector<8x8xf32>
    %cst_104 = arith.constant dense<0xFF800000> : vector<8xf32>
    %176 = vector.multi_reduction <maximumf>, %175, %cst_104 [1] : vector<8x8xf32> to vector<8xf32>
    %177 = vector.shape_cast %176 : vector<8xf32> to vector<8x1xf32>
    %178 = vector.broadcast %177 : vector<8x1xf32> to vector<8x8xf32>
    %179 = arith.subf %175, %178 : vector<8x8xf32>
    %180 = math.exp %179 : vector<8x8xf32>
    %cst_105 = arith.constant dense<0.000000e+00> : vector<8xf32>
    %181 = vector.multi_reduction <add>, %180, %cst_105 [1] : vector<8x8xf32> to vector<8xf32>
    %182 = vector.shape_cast %181 : vector<8xf32> to vector<8x1xf32>
    %183 = tpu.reciprocal %182 {approx = true} : vector<8x1xf32> -> vector<8x1xf32>
    %184 = vector.broadcast %183 : vector<8x1xf32> to vector<8x8xf32>
    %185 = arith.mulf %180, %184 : vector<8x8xf32>
    %c11 = arith.constant 11 : index
    %c0_106 = arith.constant 0 : index
    %c0_107 = arith.constant 0 : index
    %186 = vector.load %arg6[%c11, %c0_106, %c0_107] : memref<16x32x32xbf16, #tpu.memory_space<vmem>>, vector<1x32x32xbf16>
    %187 = vector.shape_cast %186 : vector<1x32x32xbf16> to vector<32x32xbf16>
    %cst_108 = arith.constant dense<0.000000e+00> : vector<8x32xf32>
    %188 = tpu.matmul %3, %187, %cst_108 {dimension_numbers = #tpu.dot_dimension_numbers<[1], [0], [0], [1], [0, 0, 1, 1], [], []>} : vector<8x32xbf16>, vector<32x32xbf16>, vector<8x32xf32> -> vector<8x32xf32>
    %189 = arith.truncf %185 : vector<8x8xf32> to vector<8x8xbf16>
    %190 = arith.truncf %188 : vector<8x32xf32> to vector<8x32xbf16>
    %cst_109 = arith.constant dense<0.000000e+00> : vector<8x32xf32>
    %191 = tpu.matmul %189, %190, %cst_109 {dimension_numbers = #tpu.dot_dimension_numbers<[1], [0], [0], [1], [0, 0, 1, 1], [], []>} : vector<8x8xbf16>, vector<8x32xbf16>, vector<8x32xf32> -> vector<8x32xf32>
    %c4_110 = arith.constant 4 : index
    %c0_111 = arith.constant 0 : index
    %c0_112 = arith.constant 0 : index
    %192 = vector.load %arg6[%c4_110, %c0_111, %c0_112] : memref<16x32x32xbf16, #tpu.memory_space<vmem>>, vector<1x32x32xbf16>
    %193 = vector.shape_cast %192 : vector<1x32x32xbf16> to vector<32x32xbf16>
    %cst_113 = arith.constant dense<0.000000e+00> : vector<8x32xf32>
    %194 = tpu.matmul %89, %193, %cst_113 {dimension_numbers = #tpu.dot_dimension_numbers<[1], [0], [0], [1], [0, 0, 1, 1], [], []>} : vector<8x32xbf16>, vector<32x32xbf16>, vector<8x32xf32> -> vector<8x32xf32>
    %195 = arith.truncf %194 : vector<8x32xf32> to vector<8x32xbf16>
    %cst_114 = arith.constant dense<0.000000e+00> : vector<8x8xf32>
    %196 = tpu.matmul %195, %2, %cst_114 {dimension_numbers = #tpu.dot_dimension_numbers<[1], [0], [0], [1], [0, 0, 1, 1], [], []>} : vector<8x32xbf16>, vector<32x8xbf16>, vector<8x8xf32> -> vector<8x8xf32>
    %197 = vector.extract_strided_slice %91 {offsets = [4, 0], sizes = [1, 8], strides = [1, 1]} : vector<8x8xf32> to vector<1x8xf32>
    %198 = vector.broadcast %197 : vector<1x8xf32> to vector<8x8xf32>
    %199 = arith.addf %196, %198 : vector<8x8xf32>
    %200 = arith.addf %199, %4 : vector<8x8xf32>
    %cst_115 = arith.constant dense<0xFF800000> : vector<8xf32>
    %201 = vector.multi_reduction <maximumf>, %200, %cst_115 [1] : vector<8x8xf32> to vector<8xf32>
    %202 = vector.shape_cast %201 : vector<8xf32> to vector<8x1xf32>
    %203 = vector.broadcast %202 : vector<8x1xf32> to vector<8x8xf32>
    %204 = arith.subf %200, %203 : vector<8x8xf32>
    %205 = math.exp %204 : vector<8x8xf32>
    %cst_116 = arith.constant dense<0.000000e+00> : vector<8xf32>
    %206 = vector.multi_reduction <add>, %205, %cst_116 [1] : vector<8x8xf32> to vector<8xf32>
    %207 = vector.shape_cast %206 : vector<8xf32> to vector<8x1xf32>
    %208 = tpu.reciprocal %207 {approx = true} : vector<8x1xf32> -> vector<8x1xf32>
    %209 = vector.broadcast %208 : vector<8x1xf32> to vector<8x8xf32>
    %210 = arith.mulf %205, %209 : vector<8x8xf32>
    %c12 = arith.constant 12 : index
    %c0_117 = arith.constant 0 : index
    %c0_118 = arith.constant 0 : index
    %211 = vector.load %arg6[%c12, %c0_117, %c0_118] : memref<16x32x32xbf16, #tpu.memory_space<vmem>>, vector<1x32x32xbf16>
    %212 = vector.shape_cast %211 : vector<1x32x32xbf16> to vector<32x32xbf16>
    %cst_119 = arith.constant dense<0.000000e+00> : vector<8x32xf32>
    %213 = tpu.matmul %3, %212, %cst_119 {dimension_numbers = #tpu.dot_dimension_numbers<[1], [0], [0], [1], [0, 0, 1, 1], [], []>} : vector<8x32xbf16>, vector<32x32xbf16>, vector<8x32xf32> -> vector<8x32xf32>
    %214 = arith.truncf %210 : vector<8x8xf32> to vector<8x8xbf16>
    %215 = arith.truncf %213 : vector<8x32xf32> to vector<8x32xbf16>
    %cst_120 = arith.constant dense<0.000000e+00> : vector<8x32xf32>
    %216 = tpu.matmul %214, %215, %cst_120 {dimension_numbers = #tpu.dot_dimension_numbers<[1], [0], [0], [1], [0, 0, 1, 1], [], []>} : vector<8x8xbf16>, vector<8x32xbf16>, vector<8x32xf32> -> vector<8x32xf32>
    %c5_121 = arith.constant 5 : index
    %c0_122 = arith.constant 0 : index
    %c0_123 = arith.constant 0 : index
    %217 = vector.load %arg6[%c5_121, %c0_122, %c0_123] : memref<16x32x32xbf16, #tpu.memory_space<vmem>>, vector<1x32x32xbf16>
    %218 = vector.shape_cast %217 : vector<1x32x32xbf16> to vector<32x32xbf16>
    %cst_124 = arith.constant dense<0.000000e+00> : vector<8x32xf32>
    %219 = tpu.matmul %89, %218, %cst_124 {dimension_numbers = #tpu.dot_dimension_numbers<[1], [0], [0], [1], [0, 0, 1, 1], [], []>} : vector<8x32xbf16>, vector<32x32xbf16>, vector<8x32xf32> -> vector<8x32xf32>
    %220 = arith.truncf %219 : vector<8x32xf32> to vector<8x32xbf16>
    %cst_125 = arith.constant dense<0.000000e+00> : vector<8x8xf32>
    %221 = tpu.matmul %220, %2, %cst_125 {dimension_numbers = #tpu.dot_dimension_numbers<[1], [0], [0], [1], [0, 0, 1, 1], [], []>} : vector<8x32xbf16>, vector<32x8xbf16>, vector<8x8xf32> -> vector<8x8xf32>
    %222 = vector.extract_strided_slice %91 {offsets = [5, 0], sizes = [1, 8], strides = [1, 1]} : vector<8x8xf32> to vector<1x8xf32>
    %223 = vector.broadcast %222 : vector<1x8xf32> to vector<8x8xf32>
    %224 = arith.addf %221, %223 : vector<8x8xf32>
    %225 = arith.addf %224, %4 : vector<8x8xf32>
    %cst_126 = arith.constant dense<0xFF800000> : vector<8xf32>
    %226 = vector.multi_reduction <maximumf>, %225, %cst_126 [1] : vector<8x8xf32> to vector<8xf32>
    %227 = vector.shape_cast %226 : vector<8xf32> to vector<8x1xf32>
    %228 = vector.broadcast %227 : vector<8x1xf32> to vector<8x8xf32>
    %229 = arith.subf %225, %228 : vector<8x8xf32>
    %230 = math.exp %229 : vector<8x8xf32>
    %cst_127 = arith.constant dense<0.000000e+00> : vector<8xf32>
    %231 = vector.multi_reduction <add>, %230, %cst_127 [1] : vector<8x8xf32> to vector<8xf32>
    %232 = vector.shape_cast %231 : vector<8xf32> to vector<8x1xf32>
    %233 = tpu.reciprocal %232 {approx = true} : vector<8x1xf32> -> vector<8x1xf32>
    %234 = vector.broadcast %233 : vector<8x1xf32> to vector<8x8xf32>
    %235 = arith.mulf %230, %234 : vector<8x8xf32>
    %c13 = arith.constant 13 : index
    %c0_128 = arith.constant 0 : index
    %c0_129 = arith.constant 0 : index
    %236 = vector.load %arg6[%c13, %c0_128, %c0_129] : memref<16x32x32xbf16, #tpu.memory_space<vmem>>, vector<1x32x32xbf16>
    %237 = vector.shape_cast %236 : vector<1x32x32xbf16> to vector<32x32xbf16>
    %cst_130 = arith.constant dense<0.000000e+00> : vector<8x32xf32>
    %238 = tpu.matmul %3, %237, %cst_130 {dimension_numbers = #tpu.dot_dimension_numbers<[1], [0], [0], [1], [0, 0, 1, 1], [], []>} : vector<8x32xbf16>, vector<32x32xbf16>, vector<8x32xf32> -> vector<8x32xf32>
    %239 = arith.truncf %235 : vector<8x8xf32> to vector<8x8xbf16>
    %240 = arith.truncf %238 : vector<8x32xf32> to vector<8x32xbf16>
    %cst_131 = arith.constant dense<0.000000e+00> : vector<8x32xf32>
    %241 = tpu.matmul %239, %240, %cst_131 {dimension_numbers = #tpu.dot_dimension_numbers<[1], [0], [0], [1], [0, 0, 1, 1], [], []>} : vector<8x8xbf16>, vector<8x32xbf16>, vector<8x32xf32> -> vector<8x32xf32>
    %c6 = arith.constant 6 : index
    %c0_132 = arith.constant 0 : index
    %c0_133 = arith.constant 0 : index
    %242 = vector.load %arg6[%c6, %c0_132, %c0_133] : memref<16x32x32xbf16, #tpu.memory_space<vmem>>, vector<1x32x32xbf16>
    %243 = vector.shape_cast %242 : vector<1x32x32xbf16> to vector<32x32xbf16>
    %cst_134 = arith.constant dense<0.000000e+00> : vector<8x32xf32>
    %244 = tpu.matmul %89, %243, %cst_134 {dimension_numbers = #tpu.dot_dimension_numbers<[1], [0], [0], [1], [0, 0, 1, 1], [], []>} : vector<8x32xbf16>, vector<32x32xbf16>, vector<8x32xf32> -> vector<8x32xf32>
    %245 = arith.truncf %244 : vector<8x32xf32> to vector<8x32xbf16>
    %cst_135 = arith.constant dense<0.000000e+00> : vector<8x8xf32>
    %246 = tpu.matmul %245, %2, %cst_135 {dimension_numbers = #tpu.dot_dimension_numbers<[1], [0], [0], [1], [0, 0, 1, 1], [], []>} : vector<8x32xbf16>, vector<32x8xbf16>, vector<8x8xf32> -> vector<8x8xf32>
    %247 = vector.extract_strided_slice %91 {offsets = [6, 0], sizes = [1, 8], strides = [1, 1]} : vector<8x8xf32> to vector<1x8xf32>
    %248 = vector.broadcast %247 : vector<1x8xf32> to vector<8x8xf32>
    %249 = arith.addf %246, %248 : vector<8x8xf32>
    %250 = arith.addf %249, %4 : vector<8x8xf32>
    %cst_136 = arith.constant dense<0xFF800000> : vector<8xf32>
    %251 = vector.multi_reduction <maximumf>, %250, %cst_136 [1] : vector<8x8xf32> to vector<8xf32>
    %252 = vector.shape_cast %251 : vector<8xf32> to vector<8x1xf32>
    %253 = vector.broadcast %252 : vector<8x1xf32> to vector<8x8xf32>
    %254 = arith.subf %250, %253 : vector<8x8xf32>
    %255 = math.exp %254 : vector<8x8xf32>
    %cst_137 = arith.constant dense<0.000000e+00> : vector<8xf32>
    %256 = vector.multi_reduction <add>, %255, %cst_137 [1] : vector<8x8xf32> to vector<8xf32>
    %257 = vector.shape_cast %256 : vector<8xf32> to vector<8x1xf32>
    %258 = tpu.reciprocal %257 {approx = true} : vector<8x1xf32> -> vector<8x1xf32>
    %259 = vector.broadcast %258 : vector<8x1xf32> to vector<8x8xf32>
    %260 = arith.mulf %255, %259 : vector<8x8xf32>
    %c14 = arith.constant 14 : index
    %c0_138 = arith.constant 0 : index
    %c0_139 = arith.constant 0 : index
    %261 = vector.load %arg6[%c14, %c0_138, %c0_139] : memref<16x32x32xbf16, #tpu.memory_space<vmem>>, vector<1x32x32xbf16>
    %262 = vector.shape_cast %261 : vector<1x32x32xbf16> to vector<32x32xbf16>
    %cst_140 = arith.constant dense<0.000000e+00> : vector<8x32xf32>
    %263 = tpu.matmul %3, %262, %cst_140 {dimension_numbers = #tpu.dot_dimension_numbers<[1], [0], [0], [1], [0, 0, 1, 1], [], []>} : vector<8x32xbf16>, vector<32x32xbf16>, vector<8x32xf32> -> vector<8x32xf32>
    %264 = arith.truncf %260 : vector<8x8xf32> to vector<8x8xbf16>
    %265 = arith.truncf %263 : vector<8x32xf32> to vector<8x32xbf16>
    %cst_141 = arith.constant dense<0.000000e+00> : vector<8x32xf32>
    %266 = tpu.matmul %264, %265, %cst_141 {dimension_numbers = #tpu.dot_dimension_numbers<[1], [0], [0], [1], [0, 0, 1, 1], [], []>} : vector<8x8xbf16>, vector<8x32xbf16>, vector<8x32xf32> -> vector<8x32xf32>
    %c7 = arith.constant 7 : index
    %c0_142 = arith.constant 0 : index
    %c0_143 = arith.constant 0 : index
    %267 = vector.load %arg6[%c7, %c0_142, %c0_143] : memref<16x32x32xbf16, #tpu.memory_space<vmem>>, vector<1x32x32xbf16>
    %268 = vector.shape_cast %267 : vector<1x32x32xbf16> to vector<32x32xbf16>
    %cst_144 = arith.constant dense<0.000000e+00> : vector<8x32xf32>
    %269 = tpu.matmul %89, %268, %cst_144 {dimension_numbers = #tpu.dot_dimension_numbers<[1], [0], [0], [1], [0, 0, 1, 1], [], []>} : vector<8x32xbf16>, vector<32x32xbf16>, vector<8x32xf32> -> vector<8x32xf32>
    %270 = arith.truncf %269 : vector<8x32xf32> to vector<8x32xbf16>
    %cst_145 = arith.constant dense<0.000000e+00> : vector<8x8xf32>
    %271 = tpu.matmul %270, %2, %cst_145 {dimension_numbers = #tpu.dot_dimension_numbers<[1], [0], [0], [1], [0, 0, 1, 1], [], []>} : vector<8x32xbf16>, vector<32x8xbf16>, vector<8x8xf32> -> vector<8x8xf32>
    %272 = vector.extract_strided_slice %91 {offsets = [7, 0], sizes = [1, 8], strides = [1, 1]} : vector<8x8xf32> to vector<1x8xf32>
    %273 = vector.broadcast %272 : vector<1x8xf32> to vector<8x8xf32>
    %274 = arith.addf %271, %273 : vector<8x8xf32>
    %275 = arith.addf %274, %4 : vector<8x8xf32>
    %cst_146 = arith.constant dense<0xFF800000> : vector<8xf32>
    %276 = vector.multi_reduction <maximumf>, %275, %cst_146 [1] : vector<8x8xf32> to vector<8xf32>
    %277 = vector.shape_cast %276 : vector<8xf32> to vector<8x1xf32>
    %278 = vector.broadcast %277 : vector<8x1xf32> to vector<8x8xf32>
    %279 = arith.subf %275, %278 : vector<8x8xf32>
    %280 = math.exp %279 : vector<8x8xf32>
    %cst_147 = arith.constant dense<0.000000e+00> : vector<8xf32>
    %281 = vector.multi_reduction <add>, %280, %cst_147 [1] : vector<8x8xf32> to vector<8xf32>
    %282 = vector.shape_cast %281 : vector<8xf32> to vector<8x1xf32>
    %283 = tpu.reciprocal %282 {approx = true} : vector<8x1xf32> -> vector<8x1xf32>
    %284 = vector.broadcast %283 : vector<8x1xf32> to vector<8x8xf32>
    %285 = arith.mulf %280, %284 : vector<8x8xf32>
    %c15 = arith.constant 15 : index
    %c0_148 = arith.constant 0 : index
    %c0_149 = arith.constant 0 : index
    %286 = vector.load %arg6[%c15, %c0_148, %c0_149] : memref<16x32x32xbf16, #tpu.memory_space<vmem>>, vector<1x32x32xbf16>
    %287 = vector.shape_cast %286 : vector<1x32x32xbf16> to vector<32x32xbf16>
    %cst_150 = arith.constant dense<0.000000e+00> : vector<8x32xf32>
    %288 = tpu.matmul %3, %287, %cst_150 {dimension_numbers = #tpu.dot_dimension_numbers<[1], [0], [0], [1], [0, 0, 1, 1], [], []>} : vector<8x32xbf16>, vector<32x32xbf16>, vector<8x32xf32> -> vector<8x32xf32>
    %289 = arith.truncf %285 : vector<8x8xf32> to vector<8x8xbf16>
    %290 = arith.truncf %288 : vector<8x32xf32> to vector<8x32xbf16>
    %cst_151 = arith.constant dense<0.000000e+00> : vector<8x32xf32>
    %291 = tpu.matmul %289, %290, %cst_151 {dimension_numbers = #tpu.dot_dimension_numbers<[1], [0], [0], [1], [0, 0, 1, 1], [], []>} : vector<8x8xbf16>, vector<8x32xbf16>, vector<8x32xf32> -> vector<8x32xf32>
    %292 = arith.addf %116, %141 : vector<8x32xf32>
    %293 = arith.addf %166, %191 : vector<8x32xf32>
    %294 = arith.addf %216, %241 : vector<8x32xf32>
    %295 = arith.addf %266, %291 : vector<8x32xf32>
    %296 = arith.addf %292, %293 : vector<8x32xf32>
    %297 = arith.addf %294, %295 : vector<8x32xf32>
    %298 = arith.addf %296, %297 : vector<8x32xf32>
    %299 = vector.broadcast %11 : vector<1x32xf32> to vector<8x32xf32>
    %300 = arith.addf %298, %299 : vector<8x32xf32>
    %301 = vector.broadcast %39 : vector<1x32xf32> to vector<8x32xf32>
    %302 = arith.mulf %301, %300 : vector<8x32xf32>
    %303 = arith.addf %302, %0 : vector<8x32xf32>
    %cst_152 = arith.constant dense<0.000000e+00> : vector<8xf32>
    %304 = vector.multi_reduction <add>, %303, %cst_152 [1] : vector<8x32xf32> to vector<8xf32>
    %305 = vector.shape_cast %304 : vector<8xf32> to vector<8x1xf32>
    %cst_153 = arith.constant 3.200000e+01 : f32
    %306 = vector.broadcast %cst_153 : f32 to vector<8x1xf32>
    %307 = arith.divf %305, %306 : vector<8x1xf32>
    %308 = vector.broadcast %307 : vector<8x1xf32> to vector<8x32xf32>
    %309 = arith.subf %303, %308 : vector<8x32xf32>
    %310 = arith.mulf %309, %309 : vector<8x32xf32>
    %cst_154 = arith.constant dense<0.000000e+00> : vector<8xf32>
    %311 = vector.multi_reduction <add>, %310, %cst_154 [1] : vector<8x32xf32> to vector<8xf32>
    %312 = vector.shape_cast %311 : vector<8xf32> to vector<8x1xf32>
    %cst_155 = arith.constant 3.200000e+01 : f32
    %313 = vector.broadcast %cst_155 : f32 to vector<8x1xf32>
    %314 = arith.divf %312, %313 : vector<8x1xf32>
    %315 = vector.broadcast %307 : vector<8x1xf32> to vector<8x32xf32>
    %316 = arith.subf %303, %315 : vector<8x32xf32>
    %cst_156 = arith.constant 9.99999974E-6 : f32
    %317 = vector.broadcast %cst_156 : f32 to vector<8x1xf32>
    %318 = arith.addf %314, %317 : vector<8x1xf32>
    %319 = math.rsqrt %318 : vector<8x1xf32>
    %320 = vector.broadcast %319 : vector<8x1xf32> to vector<8x32xf32>
    %321 = arith.mulf %316, %320 : vector<8x32xf32>
    %322 = vector.broadcast %9 : vector<1x32xf32> to vector<8x32xf32>
    %323 = arith.mulf %321, %322 : vector<8x32xf32>
    %324 = vector.broadcast %10 : vector<1x32xf32> to vector<8x32xf32>
    %325 = arith.addf %323, %324 : vector<8x32xf32>
    %cst_157 = arith.constant 1.000000e+00 : f32
    %326 = vector.broadcast %cst_157 : f32 to vector<1x32xf32>
    %327 = arith.addf %326, %53 : vector<1x32xf32>
    %328 = vector.broadcast %327 : vector<1x32xf32> to vector<8x32xf32>
    %329 = arith.mulf %325, %328 : vector<8x32xf32>
    %330 = vector.broadcast %46 : vector<1x32xf32> to vector<8x32xf32>
    %331 = arith.addf %329, %330 : vector<8x32xf32>
    %332 = arith.truncf %331 : vector<8x32xf32> to vector<8x32xbf16>
    %c0_158 = arith.constant 0 : index
    %c0_159 = arith.constant 0 : index
    %333 = vector.load %arg9[%c0_158, %c0_159] : memref<33x64xbf16, #tpu.memory_space<vmem>>, vector<32x64xbf16>
    %cst_160 = arith.constant dense<0.000000e+00> : vector<8x64xf32>
    %334 = tpu.matmul %332, %333, %cst_160 {dimension_numbers = #tpu.dot_dimension_numbers<[1], [0], [0], [1], [0, 0, 1, 1], [], []>} : vector<8x32xbf16>, vector<32x64xbf16>, vector<8x64xf32> -> vector<8x64xf32>
    %c32_161 = arith.constant 32 : index
    %c0_162 = arith.constant 0 : index
    %335 = vector.load %arg9[%c32_161, %c0_162] : memref<33x64xbf16, #tpu.memory_space<vmem>>, vector<1x64xbf16>
    %336 = arith.extf %335 : vector<1x64xbf16> to vector<1x64xf32>
    %337 = vector.broadcast %336 : vector<1x64xf32> to vector<8x64xf32>
    %338 = arith.addf %334, %337 : vector<8x64xf32>
    %cst_163 = arith.constant 0.000000e+00 : f32
    %339 = vector.broadcast %cst_163 : f32 to vector<8x64xf32>
    %340 = arith.maximumf %338, %339 : vector<8x64xf32>
    %341 = arith.truncf %340 : vector<8x64xf32> to vector<8x64xbf16>
    %c0_164 = arith.constant 0 : index
    %c0_165 = arith.constant 0 : index
    %342 = vector.load %arg10[%c0_164, %c0_165] : memref<65x32xbf16, #tpu.memory_space<vmem>>, vector<64x32xbf16>
    %cst_166 = arith.constant dense<0.000000e+00> : vector<8x32xf32>
    %343 = tpu.matmul %341, %342, %cst_166 {dimension_numbers = #tpu.dot_dimension_numbers<[1], [0], [0], [1], [0, 0, 1, 1], [], []>} : vector<8x64xbf16>, vector<64x32xbf16>, vector<8x32xf32> -> vector<8x32xf32>
    %c64 = arith.constant 64 : index
    %c0_167 = arith.constant 0 : index
    %344 = vector.load %arg10[%c64, %c0_167] : memref<65x32xbf16, #tpu.memory_space<vmem>>, vector<1x32xbf16>
    %345 = arith.extf %344 : vector<1x32xbf16> to vector<1x32xf32>
    %346 = vector.broadcast %345 : vector<1x32xf32> to vector<8x32xf32>
    %347 = arith.addf %343, %346 : vector<8x32xf32>
    %348 = vector.broadcast %60 : vector<1x32xf32> to vector<8x32xf32>
    %349 = arith.mulf %348, %347 : vector<8x32xf32>
    %350 = arith.addf %349, %303 : vector<8x32xf32>
    %c0_168 = arith.constant 0 : index
    %c0_169 = arith.constant 0 : index
    %351 = vector.load %arg12[%c0_168, %c0_169] : memref<8x32xf32, #tpu.memory_space<vmem>>, vector<8x32xf32>
    tpu.vector_store %arg12[%c0_168, %c0_169], %350 {strides = array<i32>} : memref<8x32xf32, #tpu.memory_space<vmem>>, vector<8x32xf32>,
    return
  }
  func.func @transform_0(%arg0: i32) -> (i32, i32) {
    %c0_i32 = arith.constant 0 : i32
    %c0_i32_0 = arith.constant 0 : i32
    return %arg0, %c0_i32 : i32, i32
  }
  func.func @transform_1(%arg0: i32) -> (i32, i32, i32) {
    %c0_i32 = arith.constant 0 : i32
    %c0_i32_0 = arith.constant 0 : i32
    %c0_i32_1 = arith.constant 0 : i32
    return %arg0, %c0_i32, %c0_i32_0 : i32, i32, i32
  }
  func.func @transform_2(%arg0: i32) -> (i32, i32) {
    %c0_i32 = arith.constant 0 : i32
    %c0_i32_0 = arith.constant 0 : i32
    return %arg0, %c0_i32 : i32, i32
  }
  func.func @transform_3(%arg0: i32) -> (i32, i32) {
    %c0_i32 = arith.constant 0 : i32
    %c0_i32_0 = arith.constant 0 : i32
    return %arg0, %c0_i32 : i32, i32
  }
  func.func @transform_4(%arg0: i32) -> (i32, i32, i32) {
    %c0_i32 = arith.constant 0 : i32
    %c0_i32_0 = arith.constant 0 : i32
    %c0_i32_1 = arith.constant 0 : i32
    return %arg0, %c0_i32, %c0_i32_0 : i32, i32, i32
  }
  func.func @transform_5(%arg0: i32) -> (i32, i32, i32) {
    %c0_i32 = arith.constant 0 : i32
    %c0_i32_0 = arith.constant 0 : i32
    %c0_i32_1 = arith.constant 0 : i32
    %c0_i32_2 = arith.constant 0 : i32
    return %c0_i32, %c0_i32_0, %c0_i32_1 : i32, i32, i32
  }
  func.func @transform_6(%arg0: i32) -> (i32, i32) {
    %c0_i32 = arith.constant 0 : i32
    %c0_i32_0 = arith.constant 0 : i32
    %c0_i32_1 = arith.constant 0 : i32
    return %c0_i32, %c0_i32_0 : i32, i32
  }
  func.func @transform_7(%arg0: i32) -> (i32, i32, i32) {
    %c0_i32 = arith.constant 0 : i32
    %c0_i32_0 = arith.constant 0 : i32
    %c0_i32_1 = arith.constant 0 : i32
    %c0_i32_2 = arith.constant 0 : i32
    return %c0_i32, %c0_i32_0, %c0_i32_1 : i32, i32, i32
  }
  func.func @transform_8(%arg0: i32) -> (i32, i32) {
    %c0_i32 = arith.constant 0 : i32
    %c0_i32_0 = arith.constant 0 : i32
    %c0_i32_1 = arith.constant 0 : i32
    return %c0_i32, %c0_i32_0 : i32, i32
  }
  func.func @transform_9(%arg0: i32) -> (i32, i32) {
    %c0_i32 = arith.constant 0 : i32
    %c0_i32_0 = arith.constant 0 : i32
    %c0_i32_1 = arith.constant 0 : i32
    return %c0_i32, %c0_i32_0 : i32, i32
  }
  func.func @transform_10(%arg0: i32) -> (i32, i32) {
    %c0_i32 = arith.constant 0 : i32
    %c0_i32_0 = arith.constant 0 : i32
    %c0_i32_1 = arith.constant 0 : i32
    return %c0_i32, %c0_i32_0 : i32, i32
  }
  func.func @transform_11(%arg0: i32) -> (i32, i32) {
    %c0_i32 = arith.constant 0 : i32
    %c0_i32_0 = arith.constant 0 : i32
    return %arg0, %c0_i32 : i32, i32
  }
}

</mosaic_0001>

<llo_original>
// kernel: tpu_custom_call.1
$region0: #{tpu_custom_call.1}
  #allocation0 [shape = 'u32[]', space=smem, size = 0x4, offset = 0x4, fixed_abs, tag = 'smem constant byte address 0x4 - core index']
  #allocation1 [shape = 'u32[72,128]{1,0:T(1,128)}', space=vmem, size = 0x9000, scoped, tag = 'internal scratch']
  %s0 = inlined_call_operand.vmem [shape: f32[16,32], index: 0, kind: input, shape index: {}]
  %s1 = inlined_call_operand.vmem [shape: bf16[2,32,8], index: 1, kind: input, shape index: {}]
  %s2 = inlined_call_operand.vmem [shape: bf16[16,32], index: 2, kind: input, shape index: {}]
  %s3 = inlined_call_operand.vmem [shape: f32[16,8], index: 3, kind: input, shape index: {}]
  %s4 = inlined_call_operand.vmem [shape: f32[2,1,32], index: 4, kind: input, shape index: {}]
  %s5 = inlined_call_operand.hbm [shape: bf16[16,32,32], index: 5, kind: input, shape index: {}]
  %s6 = inlined_call_operand.vmem [shape: bf16[8,32], index: 6, kind: input, shape index: {}]
  %s7 = inlined_call_operand.vmem [shape: bf16[6,33,32], index: 7, kind: input, shape index: {}]
  %s8 = inlined_call_operand.vmem [shape: bf16[33,64], index: 8, kind: input, shape index: {}]
  %s9 = inlined_call_operand.vmem [shape: bf16[65,32], index: 9, kind: input, shape index: {}]
  %s10 = inlined_call_operand.vmem [shape: f32[8,32], index: 10, kind: input, shape index: {}]
  %s11 = inlined_call_operand.hbm [shape: f32[16,32], index: 11, kind: output, shape index: {}]
  %s12 = sld [smem:[#allocation0]]
  $region81: #{tpu_custom_call.1} parent=0
    _
  %s14 = ssub.s32 1, %s12
  %s15 = scalar_select 0, %s14, %s12
  $region1: #{tpu_custom_call.1} parent=0
    #allocation2 [shape = 'u8[131072]{0}', space=vmem, size = 0x20000, scoped, tag = 'input window, operand 5, single buffered']
    #allocation3 [shape = 's32[2]{0}', space=sflag, size = 0x8, scoped, tag = 'scoped memory for tpu_custom_call.1']
    #allocation4 [shape = 's32[2]{0}', space=sflag, size = 0x8, scoped, tag = 'scoped memory for tpu_custom_call.1']
    #allocation5 [shape = 'u8[8192]{0}', space=vmem, size = 0x2000, scoped, tag = 'output window, operand 0']
    %16 = vsyncpa [#allocation3], 0
    %17 = vsyncpa [#allocation4], 0
    %s18 = scalar_lea.sflag [#allocation4], 1
    %19 = vsyncpa %s18, 0
    loop: start=0, step=1, limit=4
    $region2: #{tpu_custom_call.1} parent=1 // loop_pre_header
      _
    $region3: #{tpu_custom_call.1} parent=1 // loop_header
      %s21 = sphi 0, %s25
      %p22 = scmp.ge.s32.totalorder %s21, 4
      %s31 = sphi 0, %s33
      %s34 = sphi 0, %s31
      %s35 = sphi 0, %s34
      %s51 = sphi 0, %s35
      %s57 = sphi 0, %s59
      %s60 = sphi 0, %s57
      %s61 = sphi 0, %s60
      %s77 = sphi 0, %s61
      %s83 = sphi 0, %s85
      %s86 = sphi 0, %s83
      %s87 = sphi 0, %s86
      %s103 = sphi 0, %s87
      %s109 = sphi 0, %s111
      %s112 = sphi 0, %s109
      %s113 = sphi 0, %s112
      %s129 = sphi 0, %s113
      %s135 = sphi 0, %s137
      %s138 = sphi 0, %s135
      %s139 = sphi 0, %s138
      %s155 = sphi 0, %s139
      %s159 = sphi 0, %s159
      %s161 = sphi 0, %s159
      %s162 = sphi 0, %s161
      %s176 = sphi 0, %s162
      %s180 = sphi 0, %s180
      %s182 = sphi 0, %s180
      %s183 = sphi 0, %s182
      %s197 = sphi 0, %s183
      %s201 = sphi 0, %s201
      %s203 = sphi 0, %s201
      %s204 = sphi 0, %s203
      %s218 = sphi 0, %s204
      %s222 = sphi 0, %s222
      %s224 = sphi 0, %s222
      %s225 = sphi 0, %s224
      %s239 = sphi 0, %s225
      %s243 = sphi 0, %s243
      %s245 = sphi 0, %s243
      %s246 = sphi 0, %s245
      %s260 = sphi 0, %s246
      %s264 = sphi 0, %s264
      %s266 = sphi 0, %s264
      %s267 = sphi 0, %s266
      %s281 = sphi 0, %s267
      %s287 = sphi 0, %s289
      %s290 = sphi 0, %s287
      %s291 = sphi 0, %s290
      %s307 = sphi 0, %s291
    $region4: #{tpu_custom_call.1} parent=1 // loop_header_branch
      %24 = sbr.rel (%p22) target = $region8
    $region5: #{tpu_custom_call.1} parent=1 // loop_body
      %s26 = ssub.s32 %s21, 1
      %s27 = ssub.s32 %s21, 2
      %s28 = sadd.s32 %s21, 1
      %s29 = ssub.s32 %s21, %s28
      %p30 = scmp.eq.s32.totalorder %s29, 0
      %s32 = sadd.s32 %s31, 1
      %s33 = scalar_select %p30, %s31, %s32
      %p36 = pneg %p30
      %p37 = scmp.eq.s32.totalorder %s21, 1
      %p38 = por %p36, %p37
      %p39 = scmp.ne.s32.totalorder %s31, %s34
      %p40 = scmp.eq.s32.totalorder %s21, 0
      %p41 = por %p39, %p40
      %p42 = scmp.ne.s32.totalorder %s31, %s34
      %p43 = scmp.eq.s32.totalorder %s26, 1
      %p44 = por %p42, %p43
      %p45 = scmp.ne.s32.totalorder %s34, %s35
      %p46 = scmp.eq.s32.totalorder %s26, 0
      %p47 = por %p45, %p46
      %p48 = scmp.ne.s32.totalorder %s34, %s35
      %p49 = scmp.eq.s32.totalorder %s27, 1
      %p50 = por %p48, %p49
      %p52 = scmp.ne.s32.totalorder %s35, %s51
      %p53 = scmp.eq.s32.totalorder %s27, 0
      %p54 = por %p52, %p53
      %s55 = ssub.s32 %s21, %s28
      %p56 = scmp.eq.s32.totalorder %s55, 0
      %s58 = sadd.s32 %s57, 1
      %s59 = scalar_select %p56, %s57, %s58
      %p62 = pneg %p56
      %p63 = scmp.eq.s32.totalorder %s21, 1
      %p64 = por %p62, %p63
      %p65 = scmp.ne.s32.totalorder %s57, %s60
      %p66 = scmp.eq.s32.totalorder %s21, 0
      %p67 = por %p65, %p66
      %p68 = scmp.ne.s32.totalorder %s57, %s60
      %p69 = scmp.eq.s32.totalorder %s26, 1
      %p70 = por %p68, %p69
      %p71 = scmp.ne.s32.totalorder %s60, %s61
      %p72 = scmp.eq.s32.totalorder %s26, 0
      %p73 = por %p71, %p72
      %p74 = scmp.ne.s32.totalorder %s60, %s61
      %p75 = scmp.eq.s32.totalorder %s27, 1
      %p76 = por %p74, %p75
      %p78 = scmp.ne.s32.totalorder %s61, %s77
      %p79 = scmp.eq.s32.totalorder %s27, 0
      %p80 = por %p78, %p79
      %s81 = ssub.s32 %s21, %s28
      %p82 = scmp.eq.s32.totalorder %s81, 0
      %s84 = sadd.s32 %s83, 1
      %s85 = scalar_select %p82, %s83, %s84
      %p88 = pneg %p82
      %p89 = scmp.eq.s32.totalorder %s21, 1
      %p90 = por %p88, %p89
      %p91 = scmp.ne.s32.totalorder %s83, %s86
      %p92 = scmp.eq.s32.totalorder %s21, 0
      %p93 = por %p91, %p92
      %p94 = scmp.ne.s32.totalorder %s83, %s86
      %p95 = scmp.eq.s32.totalorder %s26, 1
      %p96 = por %p94, %p95
      %p97 = scmp.ne.s32.totalorder %s86, %s87
      %p98 = scmp.eq.s32.totalorder %s26, 0
      %p99 = por %p97, %p98
      %p100 = scmp.ne.s32.totalorder %s86, %s87
      %p101 = scmp.eq.s32.totalorder %s27, 1
      %p102 = por %p100, %p101
      %p104 = scmp.ne.s32.totalorder %s87, %s103
      %p105 = scmp.eq.s32.totalorder %s27, 0
      %p106 = por %p104, %p105
      %s107 = ssub.s32 %s21, %s28
      %p108 = scmp.eq.s32.totalorder %s107, 0
      %s110 = sadd.s32 %s109, 1
      %s111 = scalar_select %p108, %s109, %s110
      %p114 = pneg %p108
      %p115 = scmp.eq.s32.totalorder %s21, 1
      %p116 = por %p114, %p115
      %p117 = scmp.ne.s32.totalorder %s109, %s112
      %p118 = scmp.eq.s32.totalorder %s21, 0
      %p119 = por %p117, %p118
      %p120 = scmp.ne.s32.totalorder %s109, %s112
      %p121 = scmp.eq.s32.totalorder %s26, 1
      %p122 = por %p120, %p121
      %p123 = scmp.ne.s32.totalorder %s112, %s113
      %p124 = scmp.eq.s32.totalorder %s26, 0
      %p125 = por %p123, %p124
      %p126 = scmp.ne.s32.totalorder %s112, %s113
      %p127 = scmp.eq.s32.totalorder %s27, 1
      %p128 = por %p126, %p127
      %p130 = scmp.ne.s32.totalorder %s113, %s129
      %p131 = scmp.eq.s32.totalorder %s27, 0
      %p132 = por %p130, %p131
      %s133 = ssub.s32 %s21, %s28
      %p134 = scmp.eq.s32.totalorder %s133, 0
      %s136 = sadd.s32 %s135, 1
      %s137 = scalar_select %p134, %s135, %s136
      %p140 = pneg %p134
      %p141 = scmp.eq.s32.totalorder %s21, 1
      %p142 = por %p140, %p141
      %p143 = scmp.ne.s32.totalorder %s135, %s138
      %p144 = scmp.eq.s32.totalorder %s21, 0
      %p145 = por %p143, %p144
      %p146 = scmp.ne.s32.totalorder %s135, %s138
      %p147 = scmp.eq.s32.totalorder %s26, 1
      %p148 = por %p146, %p147
      %p149 = scmp.ne.s32.totalorder %s138, %s139
      %p150 = scmp.eq.s32.totalorder %s26, 0
      %p151 = por %p149, %p150
      %p152 = scmp.ne.s32.totalorder %s138, %s139
      %p153 = scmp.eq.s32.totalorder %s27, 1
      %p154 = por %p152, %p153
      %p156 = scmp.ne.s32.totalorder %s139, %s155
      %p157 = scmp.eq.s32.totalorder %s27, 0
      %p158 = por %p156, %p157
      %s160 = sadd.s32 %s159, 1
      %p163 = scmp.eq.s32.totalorder %s21, 1
      %p164 = scmp.ne.s32.totalorder %s159, %s161
      %p165 = scmp.eq.s32.totalorder %s21, 0
      %p166 = por %p164, %p165
      %p167 = scmp.ne.s32.totalorder %s159, %s161
      %p168 = scmp.eq.s32.totalorder %s26, 1
      %p169 = por %p167, %p168
      %p170 = scmp.ne.s32.totalorder %s161, %s162
      %p171 = scmp.eq.s32.totalorder %s26, 0
      %p172 = por %p170, %p171
      %p173 = scmp.ne.s32.totalorder %s161, %s162
      %p174 = scmp.eq.s32.totalorder %s27, 1
      %p175 = por %p173, %p174
      %p177 = scmp.ne.s32.totalorder %s162, %s176
      %p178 = scmp.eq.s32.totalorder %s27, 0
      %p179 = por %p177, %p178
      %s181 = sadd.s32 %s180, 1
      %p184 = scmp.eq.s32.totalorder %s21, 1
      %p185 = scmp.ne.s32.totalorder %s180, %s182
      %p186 = scmp.eq.s32.totalorder %s21, 0
      %p187 = por %p185, %p186
      %p188 = scmp.ne.s32.totalorder %s180, %s182
      %p189 = scmp.eq.s32.totalorder %s26, 1
      %p190 = por %p188, %p189
      %p191 = scmp.ne.s32.totalorder %s182, %s183
      %p192 = scmp.eq.s32.totalorder %s26, 0
      %p193 = por %p191, %p192
      %p194 = scmp.ne.s32.totalorder %s182, %s183
      %p195 = scmp.eq.s32.totalorder %s27, 1
      %p196 = por %p194, %p195
      %p198 = scmp.ne.s32.totalorder %s183, %s197
      %p199 = scmp.eq.s32.totalorder %s27, 0
      %p200 = por %p198, %p199
      %s202 = sadd.s32 %s201, 1
      %p205 = scmp.eq.s32.totalorder %s21, 1
      %p206 = scmp.ne.s32.totalorder %s201, %s203
      %p207 = scmp.eq.s32.totalorder %s21, 0
      %p208 = por %p206, %p207
      %p209 = scmp.ne.s32.totalorder %s201, %s203
      %p210 = scmp.eq.s32.totalorder %s26, 1
      %p211 = por %p209, %p210
      %p212 = scmp.ne.s32.totalorder %s203, %s204
      %p213 = scmp.eq.s32.totalorder %s26, 0
      %p214 = por %p212, %p213
      %p215 = scmp.ne.s32.totalorder %s203, %s204
      %p216 = scmp.eq.s32.totalorder %s27, 1
      %p217 = por %p215, %p216
      %p219 = scmp.ne.s32.totalorder %s204, %s218
      %p220 = scmp.eq.s32.totalorder %s27, 0
      %p221 = por %p219, %p220
      %s223 = sadd.s32 %s222, 1
      %p226 = scmp.eq.s32.totalorder %s21, 1
      %p227 = scmp.ne.s32.totalorder %s222, %s224
      %p228 = scmp.eq.s32.totalorder %s21, 0
      %p229 = por %p227, %p228
      %p230 = scmp.ne.s32.totalorder %s222, %s224
      %p231 = scmp.eq.s32.totalorder %s26, 1
      %p232 = por %p230, %p231
      %p233 = scmp.ne.s32.totalorder %s224, %s225
      %p234 = scmp.eq.s32.totalorder %s26, 0
      %p235 = por %p233, %p234
      %p236 = scmp.ne.s32.totalorder %s224, %s225
      %p237 = scmp.eq.s32.totalorder %s27, 1
      %p238 = por %p236, %p237
      %p240 = scmp.ne.s32.totalorder %s225, %s239
      %p241 = scmp.eq.s32.totalorder %s27, 0
      %p242 = por %p240, %p241
      %s244 = sadd.s32 %s243, 1
      %p247 = scmp.eq.s32.totalorder %s21, 1
      %p248 = scmp.ne.s32.totalorder %s243, %s245
      %p249 = scmp.eq.s32.totalorder %s21, 0
      %p250 = por %p248, %p249
      %p251 = scmp.ne.s32.totalorder %s243, %s245
      %p252 = scmp.eq.s32.totalorder %s26, 1
      %p253 = por %p251, %p252
      %p254 = scmp.ne.s32.totalorder %s245, %s246
      %p255 = scmp.eq.s32.totalorder %s26, 0
      %p256 = por %p254, %p255
      %p257 = scmp.ne.s32.totalorder %s245, %s246
      %p258 = scmp.eq.s32.totalorder %s27, 1
      %p259 = por %p257, %p258
      %p261 = scmp.ne.s32.totalorder %s246, %s260
      %p262 = scmp.eq.s32.totalorder %s27, 0
      %p263 = por %p261, %p262
      %s265 = sadd.s32 %s264, 1
      %p268 = scmp.eq.s32.totalorder %s21, 1
      %p269 = scmp.ne.s32.totalorder %s264, %s266
      %p270 = scmp.eq.s32.totalorder %s21, 0
      %p271 = por %p269, %p270
      %p272 = scmp.ne.s32.totalorder %s264, %s266
      %p273 = scmp.eq.s32.totalorder %s26, 1
      %p274 = por %p272, %p273
      %p275 = scmp.ne.s32.totalorder %s266, %s267
      %p276 = scmp.eq.s32.totalorder %s26, 0
      %p277 = por %p275, %p276
      %p278 = scmp.ne.s32.totalorder %s266, %s267
      %p279 = scmp.eq.s32.totalorder %s27, 1
      %p280 = por %p278, %p279
      %p282 = scmp.ne.s32.totalorder %s267, %s281
      %p283 = scmp.eq.s32.totalorder %s27, 0
      %p284 = por %p282, %p283
      %s285 = ssub.s32 %s21, %s28
      %p286 = scmp.eq.s32.totalorder %s285, 0
      %s288 = sadd.s32 %s287, 1
      %s289 = scalar_select %p286, %s287, %s288
      %p292 = pneg %p286
      %p293 = scmp.eq.s32.totalorder %s21, 1
      %p294 = por %p292, %p293
      %p295 = scmp.ne.s32.totalorder %s287, %s290
      %p296 = scmp.eq.s32.totalorder %s21, 0
      %p297 = por %p295, %p296
      %p298 = scmp.ne.s32.totalorder %s287, %s290
      %p299 = scmp.eq.s32.totalorder %s26, 1
      %p300 = por %p298, %p299
      %p301 = scmp.ne.s32.totalorder %s290, %s291
      %p302 = scmp.eq.s32.totalorder %s26, 0
      %p303 = por %p301, %p302
      %p304 = scmp.ne.s32.totalorder %s290, %s291
      %p305 = scmp.eq.s32.totalorder %s27, 1
      %p306 = por %p304, %p305
      %p308 = scmp.ne.s32.totalorder %s291, %s307
      %p309 = scmp.eq.s32.totalorder %s27, 0
      %p310 = por %p308, %p309
      %p311 = scmp.le.s32.totalorder 1, %s21
      %p312 = scmp.lt.s32.totalorder %s21, 3
      %p313 = pnand %p311, %p312
      %p314 = pneg %p313
      // Predicated region
      $region9: #{tpu_custom_call.1} parent=5 // pred_check
        _
      $region10: #{tpu_custom_call.1} parent=5 // pred_check_branch
        %316 = sbr.rel (%p313) target = $region12
      $region11: #{tpu_custom_call.1} parent=5 // pred_region
        %s317 = ssub.s32 %s21, 1
        // Predicated region
        $region13: #{tpu_custom_call.1} parent=11 // pred_check
          %p318 = pneg %p172
        $region14: #{tpu_custom_call.1} parent=11 // pred_check_branch
          %320 = sbr.rel (%p318) target = $region16
        $region15: #{tpu_custom_call.1} parent=11 // pred_region
          %322 = vsyncadd [#allocation3], 0
          %s323 = sshll.u32 %s5, 4
          %s324 = int_to_ptr.hbm [resolvable:$true] %s323
          %s325 = sshll.u32 [#allocation2], 4
          %s326 = int_to_ptr.vmem [resolvable:$true] %s325
          %331 = dma.hbm_to_vmem [thread:$0]  %s324, 4096, %s326, [#allocation3], 64, 64, 4
        $region16: #{tpu_custom_call.1} parent=11 // pred_fallthru
          _
        // Predicated region
        $region17: #{tpu_custom_call.1} parent=11 // pred_check
          %p332 = pneg %p193
        $region18: #{tpu_custom_call.1} parent=11 // pred_check_branch
          %334 = sbr.rel (%p332) target = $region20
        $region19: #{tpu_custom_call.1} parent=11 // pred_region
          _
        $region20: #{tpu_custom_call.1} parent=11 // pred_fallthru
          _
        // Predicated region
        $region21: #{tpu_custom_call.1} parent=11 // pred_check
          %p335 = pneg %p214
        $region22: #{tpu_custom_call.1} parent=11 // pred_check_branch
          %337 = sbr.rel (%p335) target = $region24
        $region23: #{tpu_custom_call.1} parent=11 // pred_region
          _
        $region24: #{tpu_custom_call.1} parent=11 // pred_fallthru
          _
        // Predicated region
        $region25: #{tpu_custom_call.1} parent=11 // pred_check
          %p338 = pneg %p235
        $region26: #{tpu_custom_call.1} parent=11 // pred_check_branch
          %340 = sbr.rel (%p338) target = $region28
        $region27: #{tpu_custom_call.1} parent=11 // pred_region
          _
        $region28: #{tpu_custom_call.1} parent=11 // pred_fallthru
          _
        // Predicated region
        $region29: #{tpu_custom_call.1} parent=11 // pred_check
          %p341 = pneg %p256
        $region30: #{tpu_custom_call.1} parent=11 // pred_check_branch
          %343 = sbr.rel (%p341) target = $region32
        $region31: #{tpu_custom_call.1} parent=11 // pred_region
          _
        $region32: #{tpu_custom_call.1} parent=11 // pred_fallthru
          _
        // Predicated region
        $region33: #{tpu_custom_call.1} parent=11 // pred_check
          %p344 = pneg %p277
        $region34: #{tpu_custom_call.1} parent=11 // pred_check_branch
          %346 = sbr.rel (%p344) target = $region36
        $region35: #{tpu_custom_call.1} parent=11 // pred_region
          _
        $region36: #{tpu_custom_call.1} parent=11 // pred_fallthru
          _
      $region12: #{tpu_custom_call.1} parent=5 // pred_fallthru
        _
      %p347 = scmp.lt.s32.totalorder %s21, 2
      // Predicated region
      $region37: #{tpu_custom_call.1} parent=5 // pred_check
        %p348 = pneg %p347
      $region38: #{tpu_custom_call.1} parent=5 // pred_check_branch
        %350 = sbr.rel (%p348) target = $region40
      $region39: #{tpu_custom_call.1} parent=5 // pred_region
        // Predicated region
        $region41: #{tpu_custom_call.1} parent=39 // pred_check
          %p351 = pneg %p41
        $region42: #{tpu_custom_call.1} parent=39 // pred_check_branch
          %353 = sbr.rel (%p351) target = $region44
        $region43: #{tpu_custom_call.1} parent=39 // pred_region
          %p354 = scmp.lt.s32.totalorder %s21, 1
          %s355 = scalar_select %p354, %s21, 1
          %s356 = smul.addr %s355, 8
          %s357 = scalar_lea.vmem %s0, %s356
        $region44: #{tpu_custom_call.1} parent=39 // pred_fallthru
          _
        // Predicated region
        $region45: #{tpu_custom_call.1} parent=39 // pred_check
          %p358 = pneg %p67
        $region46: #{tpu_custom_call.1} parent=39 // pred_check_branch
          %360 = sbr.rel (%p358) target = $region48
        $region47: #{tpu_custom_call.1} parent=39 // pred_region
          %p361 = scmp.lt.s32.totalorder %s21, 1
          %s362 = scalar_select %p361, %s21, 1
          %s363 = smul.addr %s362, 4
          %s364 = smul.addr %s363, 4
          %s365 = scalar_lea.vmem %s1, %s364
        $region48: #{tpu_custom_call.1} parent=39 // pred_fallthru
          _
        // Predicated region
        $region49: #{tpu_custom_call.1} parent=39 // pred_check
          %p366 = pneg %p93
        $region50: #{tpu_custom_call.1} parent=39 // pred_check_branch
          %368 = sbr.rel (%p366) target = $region52
        $region51: #{tpu_custom_call.1} parent=39 // pred_region
          %p369 = scmp.lt.s32.totalorder %s21, 1
          %s370 = scalar_select %p369, %s21, 1
          %s371 = smul.addr %s370, 4
          %s372 = scalar_lea.vmem %s2, %s371
        $region52: #{tpu_custom_call.1} parent=39 // pred_fallthru
          _
        // Predicated region
        $region53: #{tpu_custom_call.1} parent=39 // pred_check
          %p373 = pneg %p119
        $region54: #{tpu_custom_call.1} parent=39 // pred_check_branch
          %375 = sbr.rel (%p373) target = $region56
        $region55: #{tpu_custom_call.1} parent=39 // pred_region
          %p376 = scmp.lt.s32.totalorder %s21, 1
          %s377 = scalar_select %p376, %s21, 1
          %s378 = smul.addr %s377, 8
          %s379 = scalar_lea.vmem %s3, %s378
        $region56: #{tpu_custom_call.1} parent=39 // pred_fallthru
          _
        // Predicated region
        $region57: #{tpu_custom_call.1} parent=39 // pred_check
          %p380 = pneg %p145
        $region58: #{tpu_custom_call.1} parent=39 // pred_check_branch
          %382 = sbr.rel (%p380) target = $region60
        $region59: #{tpu_custom_call.1} parent=39 // pred_region
          %p383 = scmp.lt.s32.totalorder %s21, 1
          %s384 = scalar_select %p383, %s21, 1
          %s385 = scalar_lea.vmem %s4, %s384
        $region60: #{tpu_custom_call.1} parent=39 // pred_fallthru
          _
      $region40: #{tpu_custom_call.1} parent=5 // pred_fallthru
        _
      %p386 = scmp.le.s32.totalorder 1, %s21
      %p387 = scmp.lt.s32.totalorder %s21, 3
      %p388 = pnand %p386, %p387
      %p389 = pneg %p388
      // Predicated region
      $region61: #{tpu_custom_call.1} parent=5 // pred_check
        _
      $region62: #{tpu_custom_call.1} parent=5 // pred_check_branch
        %391 = sbr.rel (%p388) target = $region64
      $region63: #{tpu_custom_call.1} parent=5 // pred_region
        %s392 = ssub.s32 %s21, 1
        // Predicated region
        $region65: #{tpu_custom_call.1} parent=63 // pred_check
          %p393 = pneg %p172
        $region66: #{tpu_custom_call.1} parent=63 // pred_check_branch
          %395 = sbr.rel (%p393) target = $region68
        $region67: #{tpu_custom_call.1} parent=63 // pred_region
          %397 = dma.done [#allocation3], 4096
        $region68: #{tpu_custom_call.1} parent=63 // pred_fallthru
          _
        %p398 = scmp.lt.s32.totalorder %s26, 1
        %s399 = scalar_select %p398, %s26, 1
        %s400 = smul.addr %s399, 8
        %s401 = scalar_lea.vmem %s0, %s400
        %p402 = pneg %p47
        %p403 = pneg %p44
        %p404 = scmp.lt.s32.totalorder %s26, 1
        %s405 = scalar_select %p404, %s26, 1
        %s406 = smul.addr %s405, 4
        %s407 = smul.addr %s406, 4
        %s408 = scalar_lea.vmem %s1, %s407
        %p409 = pneg %p73
        %p410 = pneg %p70
        %p411 = scmp.lt.s32.totalorder %s26, 1
        %s412 = scalar_select %p411, %s26, 1
        %s413 = smul.addr %s412, 4
        %s414 = scalar_lea.vmem %s2, %s413
        %p415 = pneg %p99
        %p416 = pneg %p96
        %p417 = scmp.lt.s32.totalorder %s26, 1
        %s418 = scalar_select %p417, %s26, 1
        %s419 = smul.addr %s418, 8
        %s420 = scalar_lea.vmem %s3, %s419
        %p421 = pneg %p125
        %p422 = pneg %p122
        %p423 = scmp.lt.s32.totalorder %s26, 1
        %s424 = scalar_select %p423, %s26, 1
        %s425 = scalar_lea.vmem %s4, %s424
        %p426 = pneg %p151
        %p427 = pneg %p148
        %p428 = pneg %p172
        %p429 = pneg %p169
        %p430 = pneg %p193
        %p431 = pneg %p190
        %p432 = pneg %p214
        %p433 = pneg %p211
        %p434 = pneg %p235
        %p435 = pneg %p232
        %p436 = pneg %p256
        %p437 = pneg %p253
        %p438 = pneg %p277
        %p439 = pneg %p274
        %p440 = pneg %p303
        %p441 = pneg %p300
        %s442 = sand.u32 %s290, 1
        %s443 = scalar_lea.sflag [#allocation4], %s442
        %s444 = sand.u32 %s290, 1
        %s445 = smul.addr %s444, 8
        %s446 = scalar_lea.vmem [#allocation5], %s445
        %p447 = scmp.lt.s32.totalorder %s26, 1
        %s448 = scalar_select %p447, %s26, 1
        %s449 = smul.addr %s448, 8
        %s450 = scalar_lea.vmem %s0, %s449
        %p451 = scmp.lt.s32.totalorder %s26, 1
        %s452 = scalar_select %p451, %s26, 1
        %s453 = smul.addr %s452, 4
        %s454 = smul.addr %s453, 4
        %s455 = scalar_lea.vmem %s1, %s454
        %p456 = scmp.lt.s32.totalorder %s26, 1
        %s457 = scalar_select %p456, %s26, 1
        %s458 = smul.addr %s457, 4
        %s459 = scalar_lea.vmem %s2, %s458
        %p460 = scmp.lt.s32.totalorder %s26, 1
        %s461 = scalar_select %p460, %s26, 1
        %s462 = smul.addr %s461, 8
        %s463 = scalar_lea.vmem %s3, %s462
        %p464 = scmp.lt.s32.totalorder %s26, 1
        %s465 = scalar_select %p464, %s26, 1
        %s466 = scalar_lea.vmem %s4, %s465
        %v468 = vld [vmem:[%s450] sm:$0xff]
        %v469 = vld [vmem:[%s455] sm:$0xf]
        %v470 = vld [vmem:[%s455 + $0x4] sm:$0xf]
        %v471 = vld [vmem:[%s455 + $0x8] sm:$0xf]
        %v472 = vld [vmem:[%s455 + $0xc] sm:$0xf]
        %v473 = vld [vmem:[%s459] sm:$0xf]
        %v474 = vld [vmem:[%s463] sm:$0xff]
        %v475 = vld [vmem:[%s466] sm:$0x1]
        %v476 = vld [vmem:[%s10] sm:$0x1]
        %v477 = vld [vmem:[%s10 + $0x1] sm:$0x1]
        %v478 = vld [vmem:[%s10 + $0x2] sm:$0x1]
        %v479 = vld [vmem:[%s10 + $0x3] sm:$0x1]
        %v480 = vld [vmem:[%s10 + $0x4] sm:$0x1]
        %v481 = vxor.u32 %v475, 2147483648
        %v482 = vmul.f32 %v481, 1.442695
        %v483 = vpow.pop %v482
        %v484 = vadd.f32 %v483, 1.0
        %v485 = vrcp.pop %v484
        %v486 = vmul.f32 %v484, %v485
        %v487 = vsub.f32 1.0, %v486
        %v488 = vmul.f32 %v485, %v487
        %v489 = vadd.f32 %v485, %v488
        %vm490 = vweird.f32 %v484
        %vm491 = vweird.f32 %v485
        %vm492 = vmor %vm490, %vm491
        %v493 = vsel %vm492, %v485, %v489
        %v494 = vand.u32 2147483647, %v484
        %vm495 = vcmp.eq.f32.partialorder %v494, 8.507059e+37
        %v496 = vand.u32 %v484, 2147483648
        %v497 = vor.u32 1.1754944e-38, %v496
        %v498 = vsel %vm495, %v497, %v493
        %v499 = vmul.f32 1.0, %v498
        %v500 = vmul.f32 %v475, %v499
        %v501 = vpack.c.bf16 %v500, %v500
        %v502 = vld [vmem:[%s7] sm:$0xf]
        %v503 = vld [vmem:[%s7 + $0x4] sm:$0xf]
        %v504 = vld [vmem:[%s7 + $0x8] sm:$0xf]
        %v505 = vld [vmem:[%s7 + $0xc] sm:$0xf]
        %v506 = vld [vmem:[%s7 + $0x10] sm:$0x1]
        %v507 = vunpack.c.l.bf16 %v506
        %v512 = vunpack.c.l.b16 %v502
        %v513 = vunpack.c.l.b16 %v503
        %v514 = vunpack.c.l.b16 %v504
        %v515 = vunpack.c.l.b16 %v505
        %v516 = vpack.c.b16 %v513, %v512
        %v517 = vpack.c.b16 %v515, %v514
        %vm520 = vcmask 261120
        %v522 = vsel %vm520, %v501, 0
        %524 = vmatpush.bf16.msra.mxu0 0
        %525 = vmatpush.bf16.msra.mxu0 0
        %526 = vmatpush.bf16.msra.mxu0 0
        %527 = vmatpush.bf16.msra.mxu0 0
        %528 = vmatpush.bf16.msra.mxu0 0
        %529 = vmatpush.bf16.msra.mxu0 0
        %530 = vmatpush.bf16.msra.mxu0 %v517
        %531 = vmatpush.bf16.msra.mxu0 %v516
        %532 = vmatmul.bf16.gmra.mxu0 %v522
        %v533 = vpop.f32.mrf.mxu0
        %v534 = vadd.f32 %v507, %v533
        %v535 = vpop.f32.mrf.mxu0
        %536 = vdwg.mxu0
        %s537 = scalar_lea.vmem %s7, 20
        %v538 = vld [vmem:[%s537] sm:$0xf]
        %v539 = vld [vmem:[%s537 + $0x4] sm:$0xf]
        %v540 = vld [vmem:[%s537 + $0x8] sm:$0xf]
        %v541 = vld [vmem:[%s537 + $0xc] sm:$0xf]
        %v542 = vld [vmem:[%s537 + $0x10] sm:$0x1]
        %v543 = vunpack.c.l.bf16 %v542
        %v548 = vunpack.c.l.b16 %v538
        %v549 = vunpack.c.l.b16 %v539
        %v550 = vunpack.c.l.b16 %v540
        %v551 = vunpack.c.l.b16 %v541
        %v552 = vpack.c.b16 %v549, %v548
        %v553 = vpack.c.b16 %v551, %v550
        %556 = vmatpush.bf16.msra.mxu0 0
        %557 = vmatpush.bf16.msra.mxu0 0
        %558 = vmatpush.bf16.msra.mxu0 0
        %559 = vmatpush.bf16.msra.mxu0 0
        %560 = vmatpush.bf16.msra.mxu0 0
        %561 = vmatpush.bf16.msra.mxu0 0
        %562 = vmatpush.bf16.msra.mxu0 %v553
        %563 = vmatpush.bf16.msra.mxu0 %v552
        %564 = vmatmul.bf16.gmra.mxu0 %v522
        %v565 = vpop.f32.mrf.mxu0
        %v566 = vadd.f32 %v543, %v565
        %v567 = vpop.f32.mrf.mxu0
        %568 = vdwg.mxu0
        %s569 = scalar_lea.vmem %s7, 40
        %v570 = vld [vmem:[%s569] sm:$0xf]
        %v571 = vld [vmem:[%s569 + $0x4] sm:$0xf]
        %v572 = vld [vmem:[%s569 + $0x8] sm:$0xf]
        %v573 = vld [vmem:[%s569 + $0xc] sm:$0xf]
        %v574 = vld [vmem:[%s569 + $0x10] sm:$0x1]
        %v575 = vunpack.c.l.bf16 %v574
        %v580 = vunpack.c.l.b16 %v570
        %v581 = vunpack.c.l.b16 %v571
        %v582 = vunpack.c.l.b16 %v572
        %v583 = vunpack.c.l.b16 %v573
        %v584 = vpack.c.b16 %v581, %v580
        %v585 = vpack.c.b16 %v583, %v582
        %588 = vmatpush.bf16.msra.mxu0 0
        %589 = vmatpush.bf16.msra.mxu0 0
        %590 = vmatpush.bf16.msra.mxu0 0
        %591 = vmatpush.bf16.msra.mxu0 0
        %592 = vmatpush.bf16.msra.mxu0 0
        %593 = vmatpush.bf16.msra.mxu0 0
        %594 = vmatpush.bf16.msra.mxu0 %v585
        %595 = vmatpush.bf16.msra.mxu0 %v584
        %596 = vmatmul.bf16.gmra.mxu0 %v522
        %v597 = vpop.f32.mrf.mxu0
        %v598 = vadd.f32 %v575, %v597
        %v599 = vpop.f32.mrf.mxu0
        %600 = vdwg.mxu0
        %s601 = scalar_lea.vmem %s7, 60
        %v602 = vld [vmem:[%s601] sm:$0xf]
        %v603 = vld [vmem:[%s601 + $0x4] sm:$0xf]
        %v604 = vld [vmem:[%s601 + $0x8] sm:$0xf]
        %v605 = vld [vmem:[%s601 + $0xc] sm:$0xf]
        %v606 = vld [vmem:[%s601 + $0x10] sm:$0x1]
        %v607 = vunpack.c.l.bf16 %v606
        %v612 = vunpack.c.l.b16 %v602
        %v613 = vunpack.c.l.b16 %v603
        %v614 = vunpack.c.l.b16 %v604
        %v615 = vunpack.c.l.b16 %v605
        %v616 = vpack.c.b16 %v613, %v612
        %v617 = vpack.c.b16 %v615, %v614
        %620 = vmatpush.bf16.msra.mxu0 0
        %621 = vmatpush.bf16.msra.mxu0 0
        %622 = vmatpush.bf16.msra.mxu0 0
        %623 = vmatpush.bf16.msra.mxu0 0
        %624 = vmatpush.bf16.msra.mxu0 0
        %625 = vmatpush.bf16.msra.mxu0 0
        %626 = vmatpush.bf16.msra.mxu0 %v617
        %627 = vmatpush.bf16.msra.mxu0 %v616
        %628 = vmatmul.bf16.gmra.mxu0 %v522
        %v629 = vpop.f32.mrf.mxu0
        %v630 = vadd.f32 %v607, %v629
        %v631 = vpop.f32.mrf.mxu0
        %632 = vdwg.mxu0
        %s633 = scalar_lea.vmem %s7, 80
        %v634 = vld [vmem:[%s633] sm:$0xf]
        %v635 = vld [vmem:[%s633 + $0x4] sm:$0xf]
        %v636 = vld [vmem:[%s633 + $0x8] sm:$0xf]
        %v637 = vld [vmem:[%s633 + $0xc] sm:$0xf]
        %v638 = vld [vmem:[%s633 + $0x10] sm:$0x1]
        %v639 = vunpack.c.l.bf16 %v638
        %v644 = vunpack.c.l.b16 %v634
        %v645 = vunpack.c.l.b16 %v635
        %v646 = vunpack.c.l.b16 %v636
        %v647 = vunpack.c.l.b16 %v637
        %v648 = vpack.c.b16 %v645, %v644
        %v649 = vpack.c.b16 %v647, %v646
        %652 = vmatpush.bf16.msra.mxu0 0
        %653 = vmatpush.bf16.msra.mxu0 0
        %654 = vmatpush.bf16.msra.mxu0 0
        %655 = vmatpush.bf16.msra.mxu0 0
        %656 = vmatpush.bf16.msra.mxu0 0
        %657 = vmatpush.bf16.msra.mxu0 0
        %658 = vmatpush.bf16.msra.mxu0 %v649
        %659 = vmatpush.bf16.msra.mxu0 %v648
        %660 = vmatmul.bf16.gmra.mxu0 %v522
        %v661 = vpop.f32.mrf.mxu0
        %v662 = vadd.f32 %v639, %v661
        %v663 = vpop.f32.mrf.mxu0
        %664 = vdwg.mxu0
        %s665 = scalar_lea.vmem %s7, 100
        %v666 = vld [vmem:[%s665] sm:$0xf]
        %v667 = vld [vmem:[%s665 + $0x4] sm:$0xf]
        %v668 = vld [vmem:[%s665 + $0x8] sm:$0xf]
        %v669 = vld [vmem:[%s665 + $0xc] sm:$0xf]
        %v670 = vld [vmem:[%s665 + $0x10] sm:$0x1]
        %v671 = vunpack.c.l.bf16 %v670
        %v676 = vunpack.c.l.b16 %v666
        %v677 = vunpack.c.l.b16 %v667
        %v678 = vunpack.c.l.b16 %v668
        %v679 = vunpack.c.l.b16 %v669
        %v680 = vpack.c.b16 %v677, %v676
        %v681 = vpack.c.b16 %v679, %v678
        %684 = vmatpush.bf16.msra.mxu0 0
        %685 = vmatpush.bf16.msra.mxu0 0
        %686 = vmatpush.bf16.msra.mxu0 0
        %687 = vmatpush.bf16.msra.mxu0 0
        %688 = vmatpush.bf16.msra.mxu0 0
        %689 = vmatpush.bf16.msra.mxu0 0
        %690 = vmatpush.bf16.msra.mxu0 %v681
        %691 = vmatpush.bf16.msra.mxu0 %v680
        %692 = vmatmul.bf16.gmra.mxu0 %v522
        %v693 = vpop.f32.mrf.mxu0
        %v694 = vadd.f32 %v671, %v693
        %v695 = vpop.f32.mrf.mxu0
        %696 = vdwg.mxu0
        %v697 = vsel %vm520, %v468, 0.0
        %698 = vadd.xlane.f32.xlu0 %v697
        %v699 = vpop.xlane.xlu0 %698
        %v700 = vrcp.pop 32.0
        %v701 = vmul.f32 32.0, %v700
        %v702 = vsub.f32 1.0, %v701
        %v703 = vmul.f32 %v700, %v702
        %v704 = vadd.f32 %v700, %v703
        %vm705 = vweird.f32 %v700
        %v706 = vsel %vm705, %v700, %v704
        %v707 = vmul.f32 %v699, %v706
        %v708 = vsub.f32 %v468, %v707
        %v709 = vmul.f32 %v708, %v708
        %v710 = vsel %vm520, %v709, 0.0
        %711 = vadd.xlane.f32.xlu0 %v710
        %v712 = vpop.xlane.xlu0 %711
        %v713 = vmul.f32 %v712, %v706
        %v714 = vadd.f32 %v713, 1e-05
        %v715 = vrsqrt.pop %v714
        %v716 = vmul.f32 %v715, %v714
        %v717 = vmul.f32 %v716, %v715
        %v718 = vmul.f32 0.5, %v717
        %v719 = vsub.f32 1.5, %v718
        %v720 = vmul.f32 %v715, %v719
        %vm721 = vweird.f32 %v714
        %vm722 = vweird.f32 %v715
        %vm723 = vmor %vm721, %vm722
        %v724 = vsel %vm723, %v715, %v720
        %v725 = vmul.f32 %v708, %v724
        %v726 = vperm.slane %v476, 0
        %v727 = vmul.f32 %v725, %v726
        %v728 = vperm.slane %v477, 0
        %v729 = vadd.f32 %v727, %v728
        %v730 = vadd.f32 %v566, 1.0
        %v731 = vperm.slane %v730, 0
        %v732 = vmul.f32 %v729, %v731
        %v733 = vperm.slane %v534, 0
        %v734 = vadd.f32 %v732, %v733
        %v735 = vpack.c.bf16 %v734, %v734
        %v736 = vld [vmem:[%s6] sm:$0xf]
        %v741 = vunpack.c.l.b16 %v469
        %v742 = vunpack.c.l.b16 %v470
        %v743 = vunpack.c.l.b16 %v471
        %v744 = vunpack.c.l.b16 %v472
        %v745 = vpack.c.b16 %v742, %v741
        %v746 = vpack.c.b16 %v744, %v743
        %v750 = vsel %vm520, %v736, 0
        %752 = vmatpush.bf16.msra.mxu0 0
        %753 = vmatpush.bf16.msra.mxu0 0
        %754 = vmatpush.bf16.msra.mxu0 0
        %755 = vmatpush.bf16.msra.mxu0 0
        %756 = vmatpush.bf16.msra.mxu0 0
        %757 = vmatpush.bf16.msra.mxu0 0
        %758 = vmatpush.bf16.msra.mxu0 %v746
        %759 = vmatpush.bf16.msra.mxu0 %v745
        %760 = vmatmul.bf16.gmra.mxu0 %v750
        %v761 = vpop.f32.mrf.mxu0
        %v762 = vadd.f32 0.0, %v761
        %v763 = vpop.f32.mrf.mxu0
        %764 = vdwg.mxu0
        %v765 = vld [vmem:[#allocation2] sm:$0xf]
        %v766 = vld [vmem:[#allocation2 + $0x4] sm:$0xf]
        %v767 = vld [vmem:[#allocation2 + $0x8] sm:$0xf]
        %v768 = vld [vmem:[#allocation2 + $0xc] sm:$0xf]
        %v773 = vunpack.c.l.b16 %v765
        %v774 = vunpack.c.l.b16 %v766
        %v775 = vunpack.c.l.b16 %v767
        %v776 = vunpack.c.l.b16 %v768
        %v777 = vpack.c.b16 %v774, %v773
        %v778 = vpack.c.b16 %v776, %v775
        %v782 = vsel %vm520, %v735, 0
        %784 = vmatpush.bf16.msra.mxu0 0
        %785 = vmatpush.bf16.msra.mxu0 0
        %786 = vmatpush.bf16.msra.mxu0 0
        %787 = vmatpush.bf16.msra.mxu0 0
        %788 = vmatpush.bf16.msra.mxu0 0
        %789 = vmatpush.bf16.msra.mxu0 0
        %790 = vmatpush.bf16.msra.mxu0 %v778
        %791 = vmatpush.bf16.msra.mxu0 %v777
        %792 = vmatmul.bf16.gmra.mxu0 %v782
        %v793 = vpop.f32.mrf.mxu0
        %v794 = vadd.f32 0.0, %v793
        %v795 = vpop.f32.mrf.mxu0
        %796 = vdwg.mxu0
        %v797 = vpack.c.bf16 %v794, %v794
        %v798 = vperm.slane %v762, 0
        %v800 = vsel %vm520, %v797, 0
        %802 = vmatpush.bf16.msra.mxu0 0
        %803 = vmatpush.bf16.msra.mxu0 0
        %804 = vmatpush.bf16.msra.mxu0 0
        %805 = vmatpush.bf16.msra.mxu0 0
        %806 = vmatpush.bf16.msra.mxu0 0
        %807 = vmatpush.bf16.msra.mxu0 0
        %808 = vmatpush.bf16.msra.mxu0 %v746
        %809 = vmatpush.bf16.msra.mxu0 %v745
        %810 = vmatmul.bf16.gmra.mxu0 %v800
        %v811 = vpop.f32.mrf.mxu0
        %v812 = vadd.f32 %v798, %v811
        %v813 = vpop.f32.mrf.mxu0
        %814 = vdwg.mxu0
        %v815 = vadd.f32 %v812, %v474
        %vm816 = vcmask 64512
        %v817 = vsel %vm816, %v815, -inf
        %818 = vmax.xlane.f32.xlu0 %v817
        %v819 = vpop.xlane.xlu0 %818
        %v820 = vsub.f32 %v815, %v819
        %v821 = vmul.f32 %v820, 1.442695
        %v822 = vpow.pop %v821
        %v823 = vsel %vm816, %v822, 0.0
        %824 = vadd.xlane.f32.xlu0 %v823
        %v825 = vpop.xlane.xlu0 %824
        %v826 = vrcp.pop %v825
        %v827 = vmul.f32 %v822, %v826
        %s828 = scalar_lea.vmem [#allocation2], 128
        %v829 = vld [vmem:[%s828] sm:$0xf]
        %v830 = vld [vmem:[%s828 + $0x4] sm:$0xf]
        %v831 = vld [vmem:[%s828 + $0x8] sm:$0xf]
        %v832 = vld [vmem:[%s828 + $0xc] sm:$0xf]
        %v837 = vunpack.c.l.b16 %v829
        %v838 = vunpack.c.l.b16 %v830
        %v839 = vunpack.c.l.b16 %v831
        %v840 = vunpack.c.l.b16 %v832
        %v841 = vpack.c.b16 %v838, %v837
        %v842 = vpack.c.b16 %v840, %v839
        %v846 = vsel %vm520, %v473, 0
        %848 = vmatpush.bf16.msra.mxu0 0
        %849 = vmatpush.bf16.msra.mxu0 0
        %850 = vmatpush.bf16.msra.mxu0 0
        %851 = vmatpush.bf16.msra.mxu0 0
        %852 = vmatpush.bf16.msra.mxu0 0
        %853 = vmatpush.bf16.msra.mxu0 0
        %854 = vmatpush.bf16.msra.mxu0 %v842
        %855 = vmatpush.bf16.msra.mxu0 %v841
        %856 = vmatmul.bf16.gmra.mxu0 %v846
        %v857 = vpop.f32.mrf.mxu0
        %v858 = vadd.f32 0.0, %v857
        %v859 = vpop.f32.mrf.mxu0
        %860 = vdwg.mxu0
        %v861 = vpack.c.bf16 %v827, %v827
        %v862 = vpack.c.bf16 %v858, %v858
        %s863 = scalar_lea.vmem [#allocation2], 16
        %v864 = vld [vmem:[%s863] sm:$0xf]
        %v865 = vld [vmem:[%s863 + $0x4] sm:$0xf]
        %v866 = vld [vmem:[%s863 + $0x8] sm:$0xf]
        %v867 = vld [vmem:[%s863 + $0xc] sm:$0xf]
        %v872 = vunpack.c.l.b16 %v864
        %v873 = vunpack.c.l.b16 %v865
        %v874 = vunpack.c.l.b16 %v866
        %v875 = vunpack.c.l.b16 %v867
        %v876 = vpack.c.b16 %v873, %v872
        %v877 = vpack.c.b16 %v875, %v874
        %880 = vmatpush.bf16.msra.mxu0 0
        %881 = vmatpush.bf16.msra.mxu0 0
        %882 = vmatpush.bf16.msra.mxu0 0
        %883 = vmatpush.bf16.msra.mxu0 0
        %884 = vmatpush.bf16.msra.mxu0 0
        %885 = vmatpush.bf16.msra.mxu0 0
        %886 = vmatpush.bf16.msra.mxu0 %v877
        %887 = vmatpush.bf16.msra.mxu0 %v876
        %888 = vmatmul.bf16.gmra.mxu0 %v782
        %v889 = vpop.f32.mrf.mxu0
        %v890 = vadd.f32 0.0, %v889
        %v891 = vpop.f32.mrf.mxu0
        %892 = vdwg.mxu0
        %v893 = vpack.c.bf16 %v890, %v890
        %v894 = vperm.slane %v762, 1
        %v896 = vsel %vm520, %v893, 0
        %898 = vmatpush.bf16.msra.mxu0 0
        %899 = vmatpush.bf16.msra.mxu0 0
        %900 = vmatpush.bf16.msra.mxu0 0
        %901 = vmatpush.bf16.msra.mxu0 0
        %902 = vmatpush.bf16.msra.mxu0 0
        %903 = vmatpush.bf16.msra.mxu0 0
        %904 = vmatpush.bf16.msra.mxu0 %v746
        %905 = vmatpush.bf16.msra.mxu0 %v745
        %906 = vmatmul.bf16.gmra.mxu0 %v896
        %v907 = vpop.f32.mrf.mxu0
        %v908 = vadd.f32 %v894, %v907
        %v909 = vpop.f32.mrf.mxu0
        %910 = vdwg.mxu0
        %v911 = vadd.f32 %v908, %v474
        %v912 = vsel %vm816, %v911, -inf
        %913 = vmax.xlane.f32.xlu0 %v912
        %v914 = vpop.xlane.xlu0 %913
        %v915 = vsub.f32 %v911, %v914
        %v916 = vmul.f32 %v915, 1.442695
        %v917 = vpow.pop %v916
        %v918 = vsel %vm816, %v917, 0.0
        %919 = vadd.xlane.f32.xlu0 %v918
        %v920 = vpop.xlane.xlu0 %919
        %v921 = vrcp.pop %v920
        %v922 = vmul.f32 %v917, %v921
        %s923 = scalar_lea.vmem [#allocation2], 144
        %v924 = vld [vmem:[%s923] sm:$0xf]
        %v925 = vld [vmem:[%s923 + $0x4] sm:$0xf]
        %v926 = vld [vmem:[%s923 + $0x8] sm:$0xf]
        %v927 = vld [vmem:[%s923 + $0xc] sm:$0xf]
        %v932 = vunpack.c.l.b16 %v924
        %v933 = vunpack.c.l.b16 %v925
        %v934 = vunpack.c.l.b16 %v926
        %v935 = vunpack.c.l.b16 %v927
        %v936 = vpack.c.b16 %v933, %v932
        %v937 = vpack.c.b16 %v935, %v934
        %940 = vmatpush.bf16.msra.mxu0 0
        %941 = vmatpush.bf16.msra.mxu0 0
        %942 = vmatpush.bf16.msra.mxu0 0
        %943 = vmatpush.bf16.msra.mxu0 0
        %944 = vmatpush.bf16.msra.mxu0 0
        %945 = vmatpush.bf16.msra.mxu0 0
        %946 = vmatpush.bf16.msra.mxu0 %v937
        %947 = vmatpush.bf16.msra.mxu0 %v936
        %948 = vmatmul.bf16.gmra.mxu0 %v846
        %v949 = vpop.f32.mrf.mxu0
        %v950 = vadd.f32 0.0, %v949
        %v951 = vpop.f32.mrf.mxu0
        %952 = vdwg.mxu0
        %v953 = vpack.c.bf16 %v922, %v922
        %v954 = vpack.c.bf16 %v950, %v950
        %v956 = vsel %vm816, %v953, 0
        %vm958 = vcmask 1043456
        %v960 = vsel %vm958, %v954, 0
        %962 = vmatpush.bf16.msra.mxu0 0
        %963 = vmatpush.bf16.msra.mxu0 0
        %964 = vmatpush.bf16.msra.mxu0 0
        %965 = vmatpush.bf16.msra.mxu0 0
        %966 = vmatpush.bf16.msra.mxu0 0
        %967 = vmatpush.bf16.msra.mxu0 0
        %968 = vmatpush.bf16.msra.mxu0 0
        %969 = vmatpush.bf16.msra.mxu0 %v960
        %970 = vmatmul.bf16.gmra.mxu0 %v956
        %v971 = vpop.f32.mrf.mxu0
        %v972 = vadd.f32 0.0, %v971
        %v973 = vpop.f32.mrf.mxu0
        %974 = vdwg.mxu0
        %s975 = scalar_lea.vmem [#allocation2], 32
        %v976 = vld [vmem:[%s975] sm:$0xf]
        %v977 = vld [vmem:[%s975 + $0x4] sm:$0xf]
        %v978 = vld [vmem:[%s975 + $0x8] sm:$0xf]
        %v979 = vld [vmem:[%s975 + $0xc] sm:$0xf]
        %v984 = vunpack.c.l.b16 %v976
        %v985 = vunpack.c.l.b16 %v977
        %v986 = vunpack.c.l.b16 %v978
        %v987 = vunpack.c.l.b16 %v979
        %v988 = vpack.c.b16 %v985, %v984
        %v989 = vpack.c.b16 %v987, %v986
        %992 = vmatpush.bf16.msra.mxu0 0
        %993 = vmatpush.bf16.msra.mxu0 0
        %994 = vmatpush.bf16.msra.mxu0 0
        %995 = vmatpush.bf16.msra.mxu0 0
        %996 = vmatpush.bf16.msra.mxu0 0
        %997 = vmatpush.bf16.msra.mxu0 0
        %998 = vmatpush.bf16.msra.mxu0 %v989
        %999 = vmatpush.bf16.msra.mxu0 %v988
        %1000 = vmatmul.bf16.gmra.mxu0 %v782
        %v1001 = vpop.f32.mrf.mxu0
        %v1002 = vadd.f32 0.0, %v1001
        %v1003 = vpop.f32.mrf.mxu0
        %1004 = vdwg.mxu0
        %v1005 = vpack.c.bf16 %v1002, %v1002
        %v1006 = vperm.slane %v762, 2
        %v1008 = vsel %vm520, %v1005, 0
        %1010 = vmatpush.bf16.msra.mxu0 0
        %1011 = vmatpush.bf16.msra.mxu0 0
        %1012 = vmatpush.bf16.msra.mxu0 0
        %1013 = vmatpush.bf16.msra.mxu0 0
        %1014 = vmatpush.bf16.msra.mxu0 0
        %1015 = vmatpush.bf16.msra.mxu0 0
        %1016 = vmatpush.bf16.msra.mxu0 %v746
        %1017 = vmatpush.bf16.msra.mxu0 %v745
        %1018 = vmatmul.bf16.gmra.mxu0 %v1008
        %v1019 = vpop.f32.mrf.mxu0
        %v1020 = vadd.f32 %v1006, %v1019
        %v1021 = vpop.f32.mrf.mxu0
        %1022 = vdwg.mxu0
        %v1023 = vadd.f32 %v1020, %v474
        %v1024 = vsel %vm816, %v1023, -inf
        %1025 = vmax.xlane.f32.xlu0 %v1024
        %v1026 = vpop.xlane.xlu0 %1025
        %v1027 = vsub.f32 %v1023, %v1026
        %v1028 = vmul.f32 %v1027, 1.442695
        %v1029 = vpow.pop %v1028
        %v1030 = vsel %vm816, %v1029, 0.0
        %1031 = vadd.xlane.f32.xlu0 %v1030
        %v1032 = vpop.xlane.xlu0 %1031
        %v1033 = vrcp.pop %v1032
        %v1034 = vmul.f32 %v1029, %v1033
        %s1035 = scalar_lea.vmem [#allocation2], 160
        %v1036 = vld [vmem:[%s1035] sm:$0xf]
        %v1037 = vld [vmem:[%s1035 + $0x4] sm:$0xf]
        %v1038 = vld [vmem:[%s1035 + $0x8] sm:$0xf]
        %v1039 = vld [vmem:[%s1035 + $0xc] sm:$0xf]
        %v1044 = vunpack.c.l.b16 %v1036
        %v1045 = vunpack.c.l.b16 %v1037
        %v1046 = vunpack.c.l.b16 %v1038
        %v1047 = vunpack.c.l.b16 %v1039
        %v1048 = vpack.c.b16 %v1045, %v1044
        %v1049 = vpack.c.b16 %v1047, %v1046
        %1052 = vmatpush.bf16.msra.mxu0 0
        %1053 = vmatpush.bf16.msra.mxu0 0
        %1054 = vmatpush.bf16.msra.mxu0 0
        %1055 = vmatpush.bf16.msra.mxu0 0
        %1056 = vmatpush.bf16.msra.mxu0 0
        %1057 = vmatpush.bf16.msra.mxu0 0
        %1058 = vmatpush.bf16.msra.mxu0 %v1049
        %1059 = vmatpush.bf16.msra.mxu0 %v1048
        %1060 = vmatmul.bf16.gmra.mxu0 %v846
        %v1061 = vpop.f32.mrf.mxu0
        %v1062 = vadd.f32 0.0, %v1061
        %v1063 = vpop.f32.mrf.mxu0
        %1064 = vdwg.mxu0
        %v1065 = vpack.c.bf16 %v1034, %v1034
        %v1066 = vpack.c.bf16 %v1062, %v1062
        %s1067 = scalar_lea.vmem [#allocation2], 48
        %v1068 = vld [vmem:[%s1067] sm:$0xf]
        %v1069 = vld [vmem:[%s1067 + $0x4] sm:$0xf]
        %v1070 = vld [vmem:[%s1067 + $0x8] sm:$0xf]
        %v1071 = vld [vmem:[%s1067 + $0xc] sm:$0xf]
        %v1076 = vunpack.c.l.b16 %v1068
        %v1077 = vunpack.c.l.b16 %v1069
        %v1078 = vunpack.c.l.b16 %v1070
        %v1079 = vunpack.c.l.b16 %v1071
        %v1080 = vpack.c.b16 %v1077, %v1076
        %v1081 = vpack.c.b16 %v1079, %v1078
        %1084 = vmatpush.bf16.msra.mxu0 0
        %1085 = vmatpush.bf16.msra.mxu0 0
        %1086 = vmatpush.bf16.msra.mxu0 0
        %1087 = vmatpush.bf16.msra.mxu0 0
        %1088 = vmatpush.bf16.msra.mxu0 0
        %1089 = vmatpush.bf16.msra.mxu0 0
        %1090 = vmatpush.bf16.msra.mxu0 %v1081
        %1091 = vmatpush.bf16.msra.mxu0 %v1080
        %1092 = vmatmul.bf16.gmra.mxu0 %v782
        %v1093 = vpop.f32.mrf.mxu0
        %v1094 = vadd.f32 0.0, %v1093
        %v1095 = vpop.f32.mrf.mxu0
        %1096 = vdwg.mxu0
        %v1097 = vpack.c.bf16 %v1094, %v1094
        %v1098 = vperm.slane %v762, 3
        %v1100 = vsel %vm520, %v1097, 0
        %1102 = vmatpush.bf16.msra.mxu0 0
        %1103 = vmatpush.bf16.msra.mxu0 0
        %1104 = vmatpush.bf16.msra.mxu0 0
        %1105 = vmatpush.bf16.msra.mxu0 0
        %1106 = vmatpush.bf16.msra.mxu0 0
        %1107 = vmatpush.bf16.msra.mxu0 0
        %1108 = vmatpush.bf16.msra.mxu0 %v746
        %1109 = vmatpush.bf16.msra.mxu0 %v745
        %1110 = vmatmul.bf16.gmra.mxu0 %v1100
        %v1111 = vpop.f32.mrf.mxu0
        %v1112 = vadd.f32 %v1098, %v1111
        %v1113 = vpop.f32.mrf.mxu0
        %1114 = vdwg.mxu0
        %v1115 = vadd.f32 %v1112, %v474
        %v1116 = vsel %vm816, %v1115, -inf
        %1117 = vmax.xlane.f32.xlu0 %v1116
        %v1118 = vpop.xlane.xlu0 %1117
        %v1119 = vsub.f32 %v1115, %v1118
        %v1120 = vmul.f32 %v1119, 1.442695
        %v1121 = vpow.pop %v1120
        %v1122 = vsel %vm816, %v1121, 0.0
        %1123 = vadd.xlane.f32.xlu0 %v1122
        %v1124 = vpop.xlane.xlu0 %1123
        %v1125 = vrcp.pop %v1124
        %v1126 = vmul.f32 %v1121, %v1125
        %s1127 = scalar_lea.vmem [#allocation2], 176
        %v1128 = vld [vmem:[%s1127] sm:$0xf]
        %v1129 = vld [vmem:[%s1127 + $0x4] sm:$0xf]
        %v1130 = vld [vmem:[%s1127 + $0x8] sm:$0xf]
        %v1131 = vld [vmem:[%s1127 + $0xc] sm:$0xf]
        %v1136 = vunpack.c.l.b16 %v1128
        %v1137 = vunpack.c.l.b16 %v1129
        %v1138 = vunpack.c.l.b16 %v1130
        %v1139 = vunpack.c.l.b16 %v1131
        %v1140 = vpack.c.b16 %v1137, %v1136
        %v1141 = vpack.c.b16 %v1139, %v1138
        %1144 = vmatpush.bf16.msra.mxu0 0
        %1145 = vmatpush.bf16.msra.mxu0 0
        %1146 = vmatpush.bf16.msra.mxu0 0
        %1147 = vmatpush.bf16.msra.mxu0 0
        %1148 = vmatpush.bf16.msra.mxu0 0
        %1149 = vmatpush.bf16.msra.mxu0 0
        %1150 = vmatpush.bf16.msra.mxu0 %v1141
        %1151 = vmatpush.bf16.msra.mxu0 %v1140
        %1152 = vmatmul.bf16.gmra.mxu0 %v846
        %v1153 = vpop.f32.mrf.mxu0
        %v1154 = vadd.f32 0.0, %v1153
        %v1155 = vpop.f32.mrf.mxu0
        %1156 = vdwg.mxu0
        %v1157 = vpack.c.bf16 %v1126, %v1126
        %v1158 = vpack.c.bf16 %v1154, %v1154
        %v1160 = vsel %vm816, %v1157, 0
        %v1163 = vsel %vm958, %v1158, 0
        %1165 = vmatpush.bf16.msra.mxu0 0
        %1166 = vmatpush.bf16.msra.mxu0 0
        %1167 = vmatpush.bf16.msra.mxu0 0
        %1168 = vmatpush.bf16.msra.mxu0 0
        %1169 = vmatpush.bf16.msra.mxu0 0
        %1170 = vmatpush.bf16.msra.mxu0 0
        %1171 = vmatpush.bf16.msra.mxu0 0
        %1172 = vmatpush.bf16.msra.mxu0 %v1163
        %1173 = vmatmul.bf16.gmra.mxu0 %v1160
        %v1174 = vpop.f32.mrf.mxu0
        %v1175 = vadd.f32 0.0, %v1174
        %v1176 = vpop.f32.mrf.mxu0
        %1177 = vdwg.mxu0
        %s1178 = scalar_lea.vmem [#allocation2], 64
        %v1179 = vld [vmem:[%s1178] sm:$0xf]
        %v1180 = vld [vmem:[%s1178 + $0x4] sm:$0xf]
        %v1181 = vld [vmem:[%s1178 + $0x8] sm:$0xf]
        %v1182 = vld [vmem:[%s1178 + $0xc] sm:$0xf]
        %v1187 = vunpack.c.l.b16 %v1179
        %v1188 = vunpack.c.l.b16 %v1180
        %v1189 = vunpack.c.l.b16 %v1181
        %v1190 = vunpack.c.l.b16 %v1182
        %v1191 = vpack.c.b16 %v1188, %v1187
        %v1192 = vpack.c.b16 %v1190, %v1189
        %1195 = vmatpush.bf16.msra.mxu0 0
        %1196 = vmatpush.bf16.msra.mxu0 0
        %1197 = vmatpush.bf16.msra.mxu0 0
        %1198 = vmatpush.bf16.msra.mxu0 0
        %1199 = vmatpush.bf16.msra.mxu0 0
        %1200 = vmatpush.bf16.msra.mxu0 0
        %1201 = vmatpush.bf16.msra.mxu0 %v1192
        %1202 = vmatpush.bf16.msra.mxu0 %v1191
        %1203 = vmatmul.bf16.gmra.mxu0 %v782
        %v1204 = vpop.f32.mrf.mxu0
        %v1205 = vadd.f32 0.0, %v1204
        %v1206 = vpop.f32.mrf.mxu0
        %1207 = vdwg.mxu0
        %v1208 = vpack.c.bf16 %v1205, %v1205
        %v1209 = vperm.slane %v762, 4
        %v1211 = vsel %vm520, %v1208, 0
        %1213 = vmatpush.bf16.msra.mxu0 0
        %1214 = vmatpush.bf16.msra.mxu0 0
        %1215 = vmatpush.bf16.msra.mxu0 0
        %1216 = vmatpush.bf16.msra.mxu0 0
        %1217 = vmatpush.bf16.msra.mxu0 0
        %1218 = vmatpush.bf16.msra.mxu0 0
        %1219 = vmatpush.bf16.msra.mxu0 %v746
        %1220 = vmatpush.bf16.msra.mxu0 %v745
        %1221 = vmatmul.bf16.gmra.mxu0 %v1211
        %v1222 = vpop.f32.mrf.mxu0
        %v1223 = vadd.f32 %v1209, %v1222
        %v1224 = vpop.f32.mrf.mxu0
        %1225 = vdwg.mxu0
        %v1226 = vadd.f32 %v1223, %v474
        %v1227 = vsel %vm816, %v1226, -inf
        %1228 = vmax.xlane.f32.xlu0 %v1227
        %v1229 = vpop.xlane.xlu0 %1228
        %v1230 = vsub.f32 %v1226, %v1229
        %v1231 = vmul.f32 %v1230, 1.442695
        %v1232 = vpow.pop %v1231
        %v1233 = vsel %vm816, %v1232, 0.0
        %1234 = vadd.xlane.f32.xlu0 %v1233
        %v1235 = vpop.xlane.xlu0 %1234
        %v1236 = vrcp.pop %v1235
        %v1237 = vmul.f32 %v1232, %v1236
        %s1238 = scalar_lea.vmem [#allocation2], 192
        %v1239 = vld [vmem:[%s1238] sm:$0xf]
        %v1240 = vld [vmem:[%s1238 + $0x4] sm:$0xf]
        %v1241 = vld [vmem:[%s1238 + $0x8] sm:$0xf]
        %v1242 = vld [vmem:[%s1238 + $0xc] sm:$0xf]
        %v1247 = vunpack.c.l.b16 %v1239
        %v1248 = vunpack.c.l.b16 %v1240
        %v1249 = vunpack.c.l.b16 %v1241
        %v1250 = vunpack.c.l.b16 %v1242
        %v1251 = vpack.c.b16 %v1248, %v1247
        %v1252 = vpack.c.b16 %v1250, %v1249
        %1255 = vmatpush.bf16.msra.mxu0 0
        %1256 = vmatpush.bf16.msra.mxu0 0
        %1257 = vmatpush.bf16.msra.mxu0 0
        %1258 = vmatpush.bf16.msra.mxu0 0
        %1259 = vmatpush.bf16.msra.mxu0 0
        %1260 = vmatpush.bf16.msra.mxu0 0
        %1261 = vmatpush.bf16.msra.mxu0 %v1252
        %1262 = vmatpush.bf16.msra.mxu0 %v1251
        %1263 = vmatmul.bf16.gmra.mxu0 %v846
        %v1264 = vpop.f32.mrf.mxu0
        %v1265 = vadd.f32 0.0, %v1264
        %v1266 = vpop.f32.mrf.mxu0
        %1267 = vdwg.mxu0
        %v1268 = vpack.c.bf16 %v1237, %v1237
        %v1269 = vpack.c.bf16 %v1265, %v1265
        %s1270 = scalar_lea.vmem [#allocation2], 80
        %v1271 = vld [vmem:[%s1270] sm:$0xf]
        %v1272 = vld [vmem:[%s1270 + $0x4] sm:$0xf]
        %v1273 = vld [vmem:[%s1270 + $0x8] sm:$0xf]
        %v1274 = vld [vmem:[%s1270 + $0xc] sm:$0xf]
        %v1279 = vunpack.c.l.b16 %v1271
        %v1280 = vunpack.c.l.b16 %v1272
        %v1281 = vunpack.c.l.b16 %v1273
        %v1282 = vunpack.c.l.b16 %v1274
        %v1283 = vpack.c.b16 %v1280, %v1279
        %v1284 = vpack.c.b16 %v1282, %v1281
        %1287 = vmatpush.bf16.msra.mxu0 0
        %1288 = vmatpush.bf16.msra.mxu0 0
        %1289 = vmatpush.bf16.msra.mxu0 0
        %1290 = vmatpush.bf16.msra.mxu0 0
        %1291 = vmatpush.bf16.msra.mxu0 0
        %1292 = vmatpush.bf16.msra.mxu0 0
        %1293 = vmatpush.bf16.msra.mxu0 %v1284
        %1294 = vmatpush.bf16.msra.mxu0 %v1283
        %1295 = vmatmul.bf16.gmra.mxu0 %v782
        %v1296 = vpop.f32.mrf.mxu0
        %v1297 = vadd.f32 0.0, %v1296
        %v1298 = vpop.f32.mrf.mxu0
        %1299 = vdwg.mxu0
        %v1300 = vpack.c.bf16 %v1297, %v1297
        %v1301 = vperm.slane %v762, 5
        %v1303 = vsel %vm520, %v1300, 0
        %1305 = vmatpush.bf16.msra.mxu0 0
        %1306 = vmatpush.bf16.msra.mxu0 0
        %1307 = vmatpush.bf16.msra.mxu0 0
        %1308 = vmatpush.bf16.msra.mxu0 0
        %1309 = vmatpush.bf16.msra.mxu0 0
        %1310 = vmatpush.bf16.msra.mxu0 0
        %1311 = vmatpush.bf16.msra.mxu0 %v746
        %1312 = vmatpush.bf16.msra.mxu0 %v745
        %1313 = vmatmul.bf16.gmra.mxu0 %v1303
        %v1314 = vpop.f32.mrf.mxu0
        %v1315 = vadd.f32 %v1301, %v1314
        %v1316 = vpop.f32.mrf.mxu0
        %1317 = vdwg.mxu0
        %v1318 = vadd.f32 %v1315, %v474
        %v1319 = vsel %vm816, %v1318, -inf
        %1320 = vmax.xlane.f32.xlu0 %v1319
        %v1321 = vpop.xlane.xlu0 %1320
        %v1322 = vsub.f32 %v1318, %v1321
        %v1323 = vmul.f32 %v1322, 1.442695
        %v1324 = vpow.pop %v1323
        %v1325 = vsel %vm816, %v1324, 0.0
        %1326 = vadd.xlane.f32.xlu0 %v1325
        %v1327 = vpop.xlane.xlu0 %1326
        %v1328 = vrcp.pop %v1327
        %v1329 = vmul.f32 %v1324, %v1328
        %s1330 = scalar_lea.vmem [#allocation2], 208
        %v1331 = vld [vmem:[%s1330] sm:$0xf]
        %v1332 = vld [vmem:[%s1330 + $0x4] sm:$0xf]
        %v1333 = vld [vmem:[%s1330 + $0x8] sm:$0xf]
        %v1334 = vld [vmem:[%s1330 + $0xc] sm:$0xf]
        %v1339 = vunpack.c.l.b16 %v1331
        %v1340 = vunpack.c.l.b16 %v1332
        %v1341 = vunpack.c.l.b16 %v1333
        %v1342 = vunpack.c.l.b16 %v1334
        %v1343 = vpack.c.b16 %v1340, %v1339
        %v1344 = vpack.c.b16 %v1342, %v1341
        %1347 = vmatpush.bf16.msra.mxu0 0
        %1348 = vmatpush.bf16.msra.mxu0 0
        %1349 = vmatpush.bf16.msra.mxu0 0
        %1350 = vmatpush.bf16.msra.mxu0 0
        %1351 = vmatpush.bf16.msra.mxu0 0
        %1352 = vmatpush.bf16.msra.mxu0 0
        %1353 = vmatpush.bf16.msra.mxu0 %v1344
        %1354 = vmatpush.bf16.msra.mxu0 %v1343
        %1355 = vmatmul.bf16.gmra.mxu0 %v846
        %v1356 = vpop.f32.mrf.mxu0
        %v1357 = vadd.f32 0.0, %v1356
        %v1358 = vpop.f32.mrf.mxu0
        %1359 = vdwg.mxu0
        %v1360 = vpack.c.bf16 %v1329, %v1329
        %v1361 = vpack.c.bf16 %v1357, %v1357
        %v1363 = vsel %vm816, %v1360, 0
        %v1366 = vsel %vm958, %v1361, 0
        %1368 = vmatpush.bf16.msra.mxu0 0
        %1369 = vmatpush.bf16.msra.mxu0 0
        %1370 = vmatpush.bf16.msra.mxu0 0
        %1371 = vmatpush.bf16.msra.mxu0 0
        %1372 = vmatpush.bf16.msra.mxu0 0
        %1373 = vmatpush.bf16.msra.mxu0 0
        %1374 = vmatpush.bf16.msra.mxu0 0
        %1375 = vmatpush.bf16.msra.mxu0 %v1366
        %1376 = vmatmul.bf16.gmra.mxu0 %v1363
        %v1377 = vpop.f32.mrf.mxu0
        %v1378 = vadd.f32 0.0, %v1377
        %v1379 = vpop.f32.mrf.mxu0
        %1380 = vdwg.mxu0
        %s1381 = scalar_lea.vmem [#allocation2], 96
        %v1382 = vld [vmem:[%s1381] sm:$0xf]
        %v1383 = vld [vmem:[%s1381 + $0x4] sm:$0xf]
        %v1384 = vld [vmem:[%s1381 + $0x8] sm:$0xf]
        %v1385 = vld [vmem:[%s1381 + $0xc] sm:$0xf]
        %v1390 = vunpack.c.l.b16 %v1382
        %v1391 = vunpack.c.l.b16 %v1383
        %v1392 = vunpack.c.l.b16 %v1384
        %v1393 = vunpack.c.l.b16 %v1385
        %v1394 = vpack.c.b16 %v1391, %v1390
        %v1395 = vpack.c.b16 %v1393, %v1392
        %1398 = vmatpush.bf16.msra.mxu0 0
        %1399 = vmatpush.bf16.msra.mxu0 0
        %1400 = vmatpush.bf16.msra.mxu0 0
        %1401 = vmatpush.bf16.msra.mxu0 0
        %1402 = vmatpush.bf16.msra.mxu0 0
        %1403 = vmatpush.bf16.msra.mxu0 0
        %1404 = vmatpush.bf16.msra.mxu0 %v1395
        %1405 = vmatpush.bf16.msra.mxu0 %v1394
        %1406 = vmatmul.bf16.gmra.mxu0 %v782
        %v1407 = vpop.f32.mrf.mxu0
        %v1408 = vadd.f32 0.0, %v1407
        %v1409 = vpop.f32.mrf.mxu0
        %1410 = vdwg.mxu0
        %v1411 = vpack.c.bf16 %v1408, %v1408
        %v1412 = vperm.slane %v762, 6
        %v1414 = vsel %vm520, %v1411, 0
        %1416 = vmatpush.bf16.msra.mxu0 0
        %1417 = vmatpush.bf16.msra.mxu0 0
        %1418 = vmatpush.bf16.msra.mxu0 0
        %1419 = vmatpush.bf16.msra.mxu0 0
        %1420 = vmatpush.bf16.msra.mxu0 0
        %1421 = vmatpush.bf16.msra.mxu0 0
        %1422 = vmatpush.bf16.msra.mxu0 %v746
        %1423 = vmatpush.bf16.msra.mxu0 %v745
        %1424 = vmatmul.bf16.gmra.mxu0 %v1414
        %v1425 = vpop.f32.mrf.mxu0
        %v1426 = vadd.f32 %v1412, %v1425
        %v1427 = vpop.f32.mrf.mxu0
        %1428 = vdwg.mxu0
        %v1429 = vadd.f32 %v1426, %v474
        %v1430 = vsel %vm816, %v1429, -inf
        %1431 = vmax.xlane.f32.xlu0 %v1430
        %v1432 = vpop.xlane.xlu0 %1431
        %v1433 = vsub.f32 %v1429, %v1432
        %v1434 = vmul.f32 %v1433, 1.442695
        %v1435 = vpow.pop %v1434
        %v1436 = vsel %vm816, %v1435, 0.0
        %1437 = vadd.xlane.f32.xlu0 %v1436
        %v1438 = vpop.xlane.xlu0 %1437
        %v1439 = vrcp.pop %v1438
        %v1440 = vmul.f32 %v1435, %v1439
        %s1441 = scalar_lea.vmem [#allocation2], 224
        %v1442 = vld [vmem:[%s1441] sm:$0xf]
        %v1443 = vld [vmem:[%s1441 + $0x4] sm:$0xf]
        %v1444 = vld [vmem:[%s1441 + $0x8] sm:$0xf]
        %v1445 = vld [vmem:[%s1441 + $0xc] sm:$0xf]
        %v1450 = vunpack.c.l.b16 %v1442
        %v1451 = vunpack.c.l.b16 %v1443
        %v1452 = vunpack.c.l.b16 %v1444
        %v1453 = vunpack.c.l.b16 %v1445
        %v1454 = vpack.c.b16 %v1451, %v1450
        %v1455 = vpack.c.b16 %v1453, %v1452
        %1458 = vmatpush.bf16.msra.mxu0 0
        %1459 = vmatpush.bf16.msra.mxu0 0
        %1460 = vmatpush.bf16.msra.mxu0 0
        %1461 = vmatpush.bf16.msra.mxu0 0
        %1462 = vmatpush.bf16.msra.mxu0 0
        %1463 = vmatpush.bf16.msra.mxu0 0
        %1464 = vmatpush.bf16.msra.mxu0 %v1455
        %1465 = vmatpush.bf16.msra.mxu0 %v1454
        %1466 = vmatmul.bf16.gmra.mxu0 %v846
        %v1467 = vpop.f32.mrf.mxu0
        %v1468 = vadd.f32 0.0, %v1467
        %v1469 = vpop.f32.mrf.mxu0
        %1470 = vdwg.mxu0
        %v1471 = vpack.c.bf16 %v1440, %v1440
        %v1472 = vpack.c.bf16 %v1468, %v1468
        %s1473 = scalar_lea.vmem [#allocation2], 112
        %v1474 = vld [vmem:[%s1473] sm:$0xf]
        %v1475 = vld [vmem:[%s1473 + $0x4] sm:$0xf]
        %v1476 = vld [vmem:[%s1473 + $0x8] sm:$0xf]
        %v1477 = vld [vmem:[%s1473 + $0xc] sm:$0xf]
        %v1482 = vunpack.c.l.b16 %v1474
        %v1483 = vunpack.c.l.b16 %v1475
        %v1484 = vunpack.c.l.b16 %v1476
        %v1485 = vunpack.c.l.b16 %v1477
        %v1486 = vpack.c.b16 %v1483, %v1482
        %v1487 = vpack.c.b16 %v1485, %v1484
        %1490 = vmatpush.bf16.msra.mxu0 0
        %1491 = vmatpush.bf16.msra.mxu0 0
        %1492 = vmatpush.bf16.msra.mxu0 0
        %1493 = vmatpush.bf16.msra.mxu0 0
        %1494 = vmatpush.bf16.msra.mxu0 0
        %1495 = vmatpush.bf16.msra.mxu0 0
        %1496 = vmatpush.bf16.msra.mxu0 %v1487
        %1497 = vmatpush.bf16.msra.mxu0 %v1486
        %1498 = vmatmul.bf16.gmra.mxu0 %v782
        %v1499 = vpop.f32.mrf.mxu0
        %v1500 = vadd.f32 0.0, %v1499
        %v1501 = vpop.f32.mrf.mxu0
        %1502 = vdwg.mxu0
        %v1503 = vpack.c.bf16 %v1500, %v1500
        %v1504 = vperm.slane %v762, 7
        %v1506 = vsel %vm520, %v1503, 0
        %1508 = vmatpush.bf16.msra.mxu0 0
        %1509 = vmatpush.bf16.msra.mxu0 0
        %1510 = vmatpush.bf16.msra.mxu0 0
        %1511 = vmatpush.bf16.msra.mxu0 0
        %1512 = vmatpush.bf16.msra.mxu0 0
        %1513 = vmatpush.bf16.msra.mxu0 0
        %1514 = vmatpush.bf16.msra.mxu0 %v746
        %1515 = vmatpush.bf16.msra.mxu0 %v745
        %1516 = vmatmul.bf16.gmra.mxu0 %v1506
        %v1517 = vpop.f32.mrf.mxu0
        %v1518 = vadd.f32 %v1504, %v1517
        %v1519 = vpop.f32.mrf.mxu0
        %1520 = vdwg.mxu0
        %v1521 = vadd.f32 %v1518, %v474
        %v1522 = vsel %vm816, %v1521, -inf
        %1523 = vmax.xlane.f32.xlu0 %v1522
        %v1524 = vpop.xlane.xlu0 %1523
        %v1525 = vsub.f32 %v1521, %v1524
        %v1526 = vmul.f32 %v1525, 1.442695
        %v1527 = vpow.pop %v1526
        %v1528 = vsel %vm816, %v1527, 0.0
        %1529 = vadd.xlane.f32.xlu0 %v1528
        %v1530 = vpop.xlane.xlu0 %1529
        %v1531 = vrcp.pop %v1530
        %v1532 = vmul.f32 %v1527, %v1531
        %s1533 = scalar_lea.vmem [#allocation2], 240
        %v1534 = vld [vmem:[%s1533] sm:$0xf]
        %v1535 = vld [vmem:[%s1533 + $0x4] sm:$0xf]
        %v1536 = vld [vmem:[%s1533 + $0x8] sm:$0xf]
        %v1537 = vld [vmem:[%s1533 + $0xc] sm:$0xf]
        %v1542 = vunpack.c.l.b16 %v1534
        %v1543 = vunpack.c.l.b16 %v1535
        %v1544 = vunpack.c.l.b16 %v1536
        %v1545 = vunpack.c.l.b16 %v1537
        %v1546 = vpack.c.b16 %v1543, %v1542
        %v1547 = vpack.c.b16 %v1545, %v1544
        %1550 = vmatpush.bf16.msra.mxu0 0
        %1551 = vmatpush.bf16.msra.mxu0 0
        %1552 = vmatpush.bf16.msra.mxu0 0
        %1553 = vmatpush.bf16.msra.mxu0 0
        %1554 = vmatpush.bf16.msra.mxu0 0
        %1555 = vmatpush.bf16.msra.mxu0 0
        %1556 = vmatpush.bf16.msra.mxu0 %v1547
        %1557 = vmatpush.bf16.msra.mxu0 %v1546
        %1558 = vmatmul.bf16.gmra.mxu0 %v846
        %v1559 = vpop.f32.mrf.mxu0
        %v1560 = vadd.f32 0.0, %v1559
        %v1561 = vpop.f32.mrf.mxu0
        %1562 = vdwg.mxu0
        %v1563 = vpack.c.bf16 %v1532, %v1532
        %v1564 = vpack.c.bf16 %v1560, %v1560
        %v1566 = vsel %vm816, %v1563, 0
        %v1569 = vsel %vm958, %v1564, 0
        %1571 = vmatpush.bf16.msra.mxu0 0
        %1572 = vmatpush.bf16.msra.mxu0 0
        %1573 = vmatpush.bf16.msra.mxu0 0
        %1574 = vmatpush.bf16.msra.mxu0 0
        %1575 = vmatpush.bf16.msra.mxu0 0
        %1576 = vmatpush.bf16.msra.mxu0 0
        %1577 = vmatpush.bf16.msra.mxu0 0
        %1578 = vmatpush.bf16.msra.mxu0 %v1569
        %1579 = vmatmul.bf16.gmra.mxu0 %v1566
        %v1580 = vpop.f32.mrf.mxu0
        %v1581 = vadd.f32 0.0, %v1580
        %v1582 = vpop.f32.mrf.mxu0
        %1583 = vdwg.mxu0
        %v1585 = vsel %vm816, %v861, 0
        %v1588 = vsel %vm958, %v862, 0
        %1590 = vmatpush.bf16.msra.mxu0 0
        %1591 = vmatpush.bf16.msra.mxu0 0
        %1592 = vmatpush.bf16.msra.mxu0 0
        %1593 = vmatpush.bf16.msra.mxu0 0
        %1594 = vmatpush.bf16.msra.mxu0 0
        %1595 = vmatpush.bf16.msra.mxu0 0
        %1596 = vmatpush.bf16.msra.mxu0 0
        %1597 = vmatpush.bf16.msra.mxu0 %v1588
        %1598 = vmatmul.bf16.gmra.mxu0 %v1585
        %v1599 = vpop.f32.mrf.mxu0
        %v1600 = vadd.f32 %v972, %v1599
        %v1601 = vpop.f32.mrf.mxu0
        %1602 = vdwg.mxu0
        %v1604 = vsel %vm816, %v1065, 0
        %v1607 = vsel %vm958, %v1066, 0
        %1609 = vmatpush.bf16.msra.mxu0 0
        %1610 = vmatpush.bf16.msra.mxu0 0
        %1611 = vmatpush.bf16.msra.mxu0 0
        %1612 = vmatpush.bf16.msra.mxu0 0
        %1613 = vmatpush.bf16.msra.mxu0 0
        %1614 = vmatpush.bf16.msra.mxu0 0
        %1615 = vmatpush.bf16.msra.mxu0 0
        %1616 = vmatpush.bf16.msra.mxu0 %v1607
        %1617 = vmatmul.bf16.gmra.mxu0 %v1604
        %v1618 = vpop.f32.mrf.mxu0
        %v1619 = vadd.f32 %v1175, %v1618
        %v1620 = vpop.f32.mrf.mxu0
        %1621 = vdwg.mxu0
        %v1623 = vsel %vm816, %v1268, 0
        %v1626 = vsel %vm958, %v1269, 0
        %1628 = vmatpush.bf16.msra.mxu0 0
        %1629 = vmatpush.bf16.msra.mxu0 0
        %1630 = vmatpush.bf16.msra.mxu0 0
        %1631 = vmatpush.bf16.msra.mxu0 0
        %1632 = vmatpush.bf16.msra.mxu0 0
        %1633 = vmatpush.bf16.msra.mxu0 0
        %1634 = vmatpush.bf16.msra.mxu0 0
        %1635 = vmatpush.bf16.msra.mxu0 %v1626
        %1636 = vmatmul.bf16.gmra.mxu0 %v1623
        %v1637 = vpop.f32.mrf.mxu0
        %v1638 = vadd.f32 %v1378, %v1637
        %v1639 = vpop.f32.mrf.mxu0
        %1640 = vdwg.mxu0
        %v1642 = vsel %vm816, %v1471, 0
        %v1645 = vsel %vm958, %v1472, 0
        %1647 = vmatpush.bf16.msra.mxu0 0
        %1648 = vmatpush.bf16.msra.mxu0 0
        %1649 = vmatpush.bf16.msra.mxu0 0
        %1650 = vmatpush.bf16.msra.mxu0 0
        %1651 = vmatpush.bf16.msra.mxu0 0
        %1652 = vmatpush.bf16.msra.mxu0 0
        %1653 = vmatpush.bf16.msra.mxu0 0
        %1654 = vmatpush.bf16.msra.mxu0 %v1645
        %1655 = vmatmul.bf16.gmra.mxu0 %v1642
        %v1656 = vpop.f32.mrf.mxu0
        %v1657 = vadd.f32 %v1581, %v1656
        %v1658 = vpop.f32.mrf.mxu0
        %1659 = vdwg.mxu0
        %v1660 = vadd.f32 %v1600, %v1619
        %v1661 = vadd.f32 %v1638, %v1657
        %v1662 = vadd.f32 %v1660, %v1661
        %v1663 = vperm.slane %v480, 0
        %v1664 = vadd.f32 %v1662, %v1663
        %v1665 = vperm.slane %v598, 0
        %v1666 = vmul.f32 %v1665, %v1664
        %v1667 = vadd.f32 %v1666, %v468
        %v1668 = vsel %vm520, %v1667, 0.0
        %1669 = vadd.xlane.f32.xlu0 %v1668
        %v1670 = vpop.xlane.xlu0 %1669
        %v1671 = vmul.f32 %v1670, %v706
        %v1672 = vsub.f32 %v1667, %v1671
        %v1673 = vmul.f32 %v1672, %v1672
        %v1674 = vsel %vm520, %v1673, 0.0
        %1675 = vadd.xlane.f32.xlu0 %v1674
        %v1676 = vpop.xlane.xlu0 %1675
        %v1677 = vmul.f32 %v1676, %v706
        %v1678 = vadd.f32 %v1677, 1e-05
        %v1679 = vrsqrt.pop %v1678
        %v1680 = vmul.f32 %v1679, %v1678
        %v1681 = vmul.f32 %v1680, %v1679
        %v1682 = vmul.f32 0.5, %v1681
        %v1683 = vsub.f32 1.5, %v1682
        %v1684 = vmul.f32 %v1679, %v1683
        %vm1685 = vweird.f32 %v1678
        %vm1686 = vweird.f32 %v1679
        %vm1687 = vmor %vm1685, %vm1686
        %v1688 = vsel %vm1687, %v1679, %v1684
        %v1689 = vmul.f32 %v1672, %v1688
        %v1690 = vperm.slane %v478, 0
        %v1691 = vmul.f32 %v1689, %v1690
        %v1692 = vperm.slane %v479, 0
        %v1693 = vadd.f32 %v1691, %v1692
        %v1694 = vadd.f32 %v662, 1.0
        %v1695 = vperm.slane %v1694, 0
        %v1696 = vmul.f32 %v1693, %v1695
        %v1697 = vperm.slane %v630, 0
        %v1698 = vadd.f32 %v1696, %v1697
        %v1699 = vpack.c.bf16 %v1698, %v1698
        %v1700 = vld [vmem:[%s8] sm:$0xf]
        %v1701 = vld [vmem:[%s8 + $0x4] sm:$0xf]
        %v1702 = vld [vmem:[%s8 + $0x8] sm:$0xf]
        %v1703 = vld [vmem:[%s8 + $0xc] sm:$0xf]
        %v1704 = vld [vmem:[%s8 + $0x10] sm:$0x1]
        %v1705 = vunpack.c.l.bf16 %v1704
        %v1706 = vperm.slane %v1705, 0
        %v1711 = vunpack.c.l.b16 %v1700
        %v1712 = vunpack.c.l.b16 %v1701
        %v1713 = vunpack.c.l.b16 %v1702
        %v1714 = vunpack.c.l.b16 %v1703
        %v1715 = vpack.c.b16 %v1712, %v1711
        %v1716 = vpack.c.b16 %v1714, %v1713
        %v1720 = vsel %vm520, %v1699, 0
        %1722 = vmatpush.bf16.msra.mxu0 0
        %1723 = vmatpush.bf16.msra.mxu0 0
        %1724 = vmatpush.bf16.msra.mxu0 0
        %1725 = vmatpush.bf16.msra.mxu0 0
        %1726 = vmatpush.bf16.msra.mxu0 0
        %1727 = vmatpush.bf16.msra.mxu0 0
        %1728 = vmatpush.bf16.msra.mxu0 %v1716
        %1729 = vmatpush.bf16.msra.mxu0 %v1715
        %1730 = vmatmul.bf16.gmra.mxu0 %v1720
        %v1731 = vpop.f32.mrf.mxu0
        %v1732 = vadd.f32 %v1706, %v1731
        %v1733 = vpop.f32.mrf.mxu0
        %1734 = vdwg.mxu0
        %v1735 = vmax.f32 %v1732, 0.0
        %v1736 = vpack.c.bf16 %v1735, %v1735
        %v1737 = vld [vmem:[%s9] sm:$0xf]
        %v1738 = vld [vmem:[%s9 + $0x4] sm:$0xf]
        %v1739 = vld [vmem:[%s9 + $0x8] sm:$0xf]
        %v1740 = vld [vmem:[%s9 + $0xc] sm:$0xf]
        %v1741 = vld [vmem:[%s9 + $0x10] sm:$0xf]
        %v1742 = vld [vmem:[%s9 + $0x14] sm:$0xf]
        %v1743 = vld [vmem:[%s9 + $0x18] sm:$0xf]
        %v1744 = vld [vmem:[%s9 + $0x1c] sm:$0xf]
        %v1745 = vld [vmem:[%s9 + $0x20] sm:$0x1]
        %v1746 = vunpack.c.l.bf16 %v1745
        %v1747 = vperm.slane %v1746, 0
        %v1756 = vunpack.c.l.b16 %v1737
        %v1757 = vunpack.c.l.b16 %v1738
        %v1758 = vunpack.c.l.b16 %v1739
        %v1759 = vunpack.c.l.b16 %v1740
        %v1760 = vunpack.c.l.b16 %v1741
        %v1761 = vunpack.c.l.b16 %v1742
        %v1762 = vunpack.c.l.b16 %v1743
        %v1763 = vunpack.c.l.b16 %v1744
        %v1764 = vpack.c.b16 %v1757, %v1756
        %v1765 = vpack.c.b16 %v1759, %v1758
        %v1766 = vpack.c.b16 %v1761, %v1760
        %v1767 = vpack.c.b16 %v1763, %v1762
        %vm1772 = vcmask 523264
        %v1774 = vsel %vm1772, %v1736, 0
        %1776 = vmatpush.bf16.msra.mxu0 0
        %1777 = vmatpush.bf16.msra.mxu0 0
        %1778 = vmatpush.bf16.msra.mxu0 0
        %1779 = vmatpush.bf16.msra.mxu0 0
        %1780 = vmatpush.bf16.msra.mxu0 %v1767
        %1781 = vmatpush.bf16.msra.mxu0 %v1766
        %1782 = vmatpush.bf16.msra.mxu0 %v1765
        %1783 = vmatpush.bf16.msra.mxu0 %v1764
        %1784 = vmatmul.bf16.gmra.mxu0 %v1774
        %v1785 = vpop.f32.mrf.mxu0
        %v1786 = vadd.f32 %v1747, %v1785
        %v1787 = vpop.f32.mrf.mxu0
        %1788 = vdwg.mxu0
        %v1789 = vperm.slane %v694, 0
        %v1790 = vmul.f32 %v1789, %v1786
        %v1791 = vadd.f32 %v1790, %v1667
        %1792 = vst.msk [vmem:[%s446] sm:$0xff] %vm520, %v1791
        %s1793 = sand.u32 %s290, 1
        %s1794 = scalar_lea.sflag [#allocation4], %s1793
        %s1795 = sand.u32 %s290, 1
        %s1796 = smul.addr %s1795, 8
        %s1797 = scalar_lea.vmem [#allocation5], %s1796
        // Predicated region
        $region69: #{tpu_custom_call.1} parent=63 // pred_check
          %p1798 = pneg %p300
        $region70: #{tpu_custom_call.1} parent=63 // pred_check_branch
          %1800 = sbr.rel (%p1798) target = $region72
        $region71: #{tpu_custom_call.1} parent=63 // pred_region
          %1802 = vsyncadd %s1794, 0
          %s1803 = smul.addr %s26, 8
          %s1804 = scalar_lea.hbm %s11, %s1803
          %s1806 = sshll.u32 %s1797, 4
          %s1807 = int_to_ptr.vmem [resolvable:$true] %s1806
          %s1808 = sshll.u32 %s1804, 4
          %s1809 = int_to_ptr.hbm [resolvable:$true] %s1808
          %1811 = dma.vmem_to_hbm [thread:$0]  %s1807, 128, %s1809, %s1794
        $region72: #{tpu_custom_call.1} parent=63 // pred_fallthru
          _
      $region64: #{tpu_custom_call.1} parent=5 // pred_fallthru
        _
      %p1812 = scmp.le.s32.totalorder 2, %s21
      // Predicated region
      $region73: #{tpu_custom_call.1} parent=5 // pred_check
        %p1813 = pneg %p1812
      $region74: #{tpu_custom_call.1} parent=5 // pred_check_branch
        %1815 = sbr.rel (%p1813) target = $region76
      $region75: #{tpu_custom_call.1} parent=5 // pred_region
        %s1816 = ssub.s32 %s21, 2
        // Predicated region
        $region77: #{tpu_custom_call.1} parent=75 // pred_check
          %p1817 = pneg %p306
        $region78: #{tpu_custom_call.1} parent=75 // pred_check_branch
          %1819 = sbr.rel (%p1817) target = $region80
        $region79: #{tpu_custom_call.1} parent=75 // pred_region
          %s1820 = sand.u32 %s291, 1
          %s1821 = scalar_lea.sflag [#allocation4], %s1820
          %s1822 = sand.u32 %s291, 1
          %s1823 = smul.addr %s1822, 8
          %s1824 = scalar_lea.vmem [#allocation5], %s1823
          %1826 = dma.done %s1821, 128
        $region80: #{tpu_custom_call.1} parent=75 // pred_fallthru
          _
      $region76: #{tpu_custom_call.1} parent=5 // pred_fallthru
        _
    $region6: #{tpu_custom_call.1} parent=1 // loop_footer
      %s25 = sadd.s32 1, %s21
    $region7: #{tpu_custom_call.1} parent=1 // loop_footer_branch
      %20 = sbr.rel target = $region3
    $region8: #{tpu_custom_call.1} parent=1 // loop_exit
      _
    %1827 = vsyncpa [#allocation3], 1
    %s1828 = scalar_lea.sflag [#allocation3], 1
    %1829 = vsyncpa %s1828, 1
    %1830 = vsyncpa [#allocation4], 1
    %s1831 = scalar_lea.sflag [#allocation4], 1
    %1832 = vsyncpa %s1831, 1

</llo_original>
